<compile_context>
chip_gen: v5e
topology: v5e:2x2
jax: 0.10.0
libtpu: 0.0.40
codegen_flags: <defaults>
</compile_context>

<pallas_src>
import math

import jax
import jax.numpy as jnp
from jax.experimental import pallas as pl
from jax.experimental.pallas import tpu as pltpu

MARGIN = 0.9   # additive angular margin used in the PyTorch forward
SCALE = 10.0   # final "features = 10 * features" scaling
EPS = 1e-24    # eps under rsqrt (~ torch F.normalize eps=1e-12 on the norm)

MAX_TB = 128   # batch-tile cap: fills v5e's 128-wide MXU; bump to 256 for
               # v6e/v7x large-batch builds (keep >=2 batch tiles on v7x).
MAX_TK = 4096  # K-tile cap: ~4 MB of bf16 proj per step, amortizes per-grid-
               # step overhead while double-buffered proj stays ~8 MB VMEM.


def _round_up(x, m):
    return ((x + m - 1) // m) * m


def _pick_tiles(B, F):
    """Pick (tb, tk, Fp): batch tile (multiple of 16 for bf16 sublane
    packing) and K tile / padded K extent."""
    Bp = _round_up(max(B, 16), 16)
    if Bp >= 2 * MAX_TB:
        tb = MAX_TB          # >=2 batch tiles -> v7x's second TC gets work
    else:
        tb = Bp              # single tile: proj_w streamed exactly once
    tk = min(MAX_TK, _round_up(F, 256))
    Fp = _round_up(F, tk)
    return tb, tk, Fp


def prepare_backbone(proj_w, Fp):
    """One-time prep: cast the (F, 512) projection to bf16 and zero-pad K."""
    F, D = proj_w.shape
    return jnp.zeros((Fp, D), jnp.bfloat16).at[:F, :].set(
        proj_w.astype(jnp.bfloat16))


def prepare_classifier(lin_w, Cp):
    """One-time prep: L2-normalize rows of nn.Linear.weight, transpose to
    (D, Cp) and zero-pad the class dim to a lane-dense multiple of 128."""
    C, D = lin_w.shape
    wn = lin_w * jax.lax.rsqrt(
        jnp.sum(lin_w * lin_w, axis=1, keepdims=True) + EPS)
    return jnp.zeros((D, Cp), jnp.float32).at[:, :C].set(
        wn.T.astype(jnp.float32))


def arcface_head_kernel(x_ref, proj_ref, wn_ref, gt_ref, out_ref, feat_acc):
    """grid = (batch_tiles, K_tiles); K (contraction over flattened pixels)
    is the last ("arbitrary") axis, batch tiles are "parallel"."""
    k = pl.program_id(1)
    k_last = pl.num_programs(1) - 1

    # ---- stand-in backbone: feats += x_tile @ proj_tile (bf16 in, f32
    #      accumulate on the MXU) ----
    @pl.when(k == 0)
    def _():
        feat_acc[...] = jnp.zeros_like(feat_acc)

    feat_acc[...] += jnp.dot(
        x_ref[...], proj_ref[...], preferred_element_type=jnp.float32)

    # ---- ArcFace head: only once, after the K reduction finishes ----
    @pl.when(k == k_last)
    def _():
        feats = feat_acc[...]                                    # (tb, D) f32

        # L2 normalize rows: multiply by rsqrt(sum(x^2)+eps) -> EUP, no divide.
        f_inv = jax.lax.rsqrt(
            jnp.sum(feats * feats, axis=1, keepdims=True) + EPS)
        fn = feats * f_inv                                       # (tb, D)

        # cosine logits: plain NN matmul against the pre-normalized,
        # pre-transposed classifier weight (D, Cp) -> no in-kernel transpose,
        # no per-batch-tile re-normalization of W.
        logits = jnp.dot(fn, wn_ref[...],
                         preferred_element_type=jnp.float32)     # (tb, Cp)

        # gather original target logit via one-hot mask (lane-dense Cp).
        # gt stays a tiny (tb,1) VMEM block: scalar-prefetching it to SMEM
        # would need a non-vectorizable per-row gather to rebuild the one-hot
        # (review rates the win as low single-digit %), so it is kept here.
        gt = gt_ref[...]                                         # (tb,1) int32
        col = jax.lax.broadcasted_iota(jnp.int32, logits.shape, 1)
        one_hot = (col == gt).astype(jnp.float32)                # (tb, Cp)
        orig = jnp.sum(logits * one_hot, axis=1, keepdims=True)  # (tb, 1)

        # cos(acos(o) + m) == o*cos(m) - sqrt(1-o^2)*sin(m) (exact identity,
        # clamped so fp error in |o|>1 cannot NaN).
        sin_theta = jnp.sqrt(jnp.maximum(1.0 - orig * orig, 0.0))
        marg = orig * math.cos(MARGIN) - sin_theta * math.sin(MARGIN)

        out = logits + one_hot * (marg - orig)
        out_ref[...] = (SCALE * out).astype(out_ref.dtype)


def feature_extract_forward(images, gt_id, proj_p, wn_t, num_classes, *, tb, tk):
    """JAX wrapper reproducing FeatureExract.forward(images, gt_ID).

    proj_p / wn_t are the pre-prepared (cast / padded / normalized /
    transposed) parameters from prepare_backbone / prepare_classifier, so the
    per-call path only casts & pads the activations."""
    B = images.shape[0]
    x_flat = images.reshape(B, -1)
    F = x_flat.shape[1]

    Fp, D = proj_p.shape
    D2, Cp = wn_t.shape
    assert D2 == D and Fp % tk == 0 and Cp % 128 == 0

    Bp = _round_up(_round_up(max(B, 16), 16), tb)

    x_p = jnp.zeros((Bp, Fp), jnp.bfloat16).at[:B, :F].set(
        x_flat.astype(jnp.bfloat16))
    gt_p = jnp.zeros((Bp, 1), jnp.int32).at[:B, 0].set(
        gt_id.astype(jnp.int32).reshape(B))

    grid = (Bp // tb, Fp // tk)  # (batch tiles [parallel], K tiles [arbitrary])

    # VMEM footprint with MAX_TB/MAX_TK caps: 2*(tb*tk + tk*D)*2B (bf16 x/proj)
    # + 2*(D*Cp + tb*Cp)*4B + tb*D*4B  ~= 11 MB  << 32 MiB scoped default
    # (and << v7x's 64 MiB physical), so no vmem_limit_bytes override needed.
    out = pl.pallas_call(
        arcface_head_kernel,
        out_shape=jax.ShapeDtypeStruct((Bp, Cp), jnp.float32),
        grid_spec=pltpu.PrefetchScalarGridSpec(
            num_scalar_prefetch=0,
            grid=grid,
            in_specs=[
                pl.BlockSpec((tb, tk), lambda b, k: (b, k)),   # x tile (bf16)
                pl.BlockSpec((tk, D), lambda b, k: (k, 0)),    # proj tile (bf16)
                pl.BlockSpec((D, Cp), lambda b, k: (0, 0)),    # normalized W^T (resident)
                pl.BlockSpec((tb, 1), lambda b, k: (b, 0)),    # gt ids
            ],
            out_specs=pl.BlockSpec((tb, Cp), lambda b, k: (b, 0)),
            scratch_shapes=[pltpu.VMEM((tb, D), jnp.float32)],  # feature accumulator
        ),
        compiler_params=pltpu.CompilerParams(
            dimension_semantics=("parallel", "arbitrary")),
    )(x_p, proj_p, wn_t, gt_p)

    return out[:B, :num_classes]


if __name__ == "__main__":
    key = jax.random.PRNGKey(0)
    k1, k2, k3, k4 = jax.random.split(key, 4)

    B, Cin, H, W = 2, 3, 16, 16        # small NCHW input
    num_classes = 5                    # module hard-codes 5 in its one-hot
    feat_dim = 512                     # resnet18 fc.in_features

    images = jax.random.normal(k1, (B, Cin, H, W), jnp.float32)
    gt_id = jax.random.randint(k2, (B,), 0, num_classes, dtype=jnp.int32)

    # Deterministic synthetic parameters (no checkpoint loads).
    proj_w = jax.random.normal(k3, (Cin * H * W, feat_dim), jnp.float32) * 0.02
    lin_w = jax.random.normal(k4, (num_classes, feat_dim), jnp.float32) * 0.02

    F = Cin * H * W
    tb, tk, Fp = _pick_tiles(B, F)
    Cp = _round_up(max(num_classes, 128), 128)

    # Parameter prep (cast / pad / normalize / transpose) hoisted out of the
    # per-forward path: done exactly once here.
    proj_p = prepare_backbone(proj_w, Fp)
    wn_t = prepare_classifier(lin_w, Cp)

    out = feature_extract_forward(images, gt_id, proj_p, wn_t, num_classes,
                                  tb=tb, tk=tk)
    out = jax.block_until_ready(out)
    assert out.shape == (B, num_classes), out.shape
    assert bool(jnp.all(jnp.isfinite(out)))
    print("KERNEL_OK")
</pallas_src>

<mosaic_0001>
module attributes {stable_mosaic.version = 11 : i64} {
  func.func @arcface_head_kernel(%arg0: i32, %arg1: i32, %arg2: memref<16x768xbf16, #tpu.memory_space<vmem>>, %arg3: memref<768x512xbf16, #tpu.memory_space<vmem>>, %arg4: memref<512x128xf32, #tpu.memory_space<vmem>>, %arg5: memref<16x1xi32, #tpu.memory_space<vmem>>, %arg6: memref<16x128xf32, #tpu.memory_space<vmem>>, %arg7: memref<16x512xf32, #tpu.memory_space<vmem>>) attributes {dimension_semantics = [#tpu.dimension_semantics<parallel>, #tpu.dimension_semantics<arbitrary>], iteration_bounds = array<i64: 1, 1>, scalar_prefetch = 0 : i64, scratch_operands = 1 : i64, tpu.core_type = #tpu.core_type<tc>, window_params = [{transform_indices = @transform_0, window_bounds = array<i64: 16, 768>}, {transform_indices = @transform_1, window_bounds = array<i64: 768, 512>}, {pipeline_mode = #tpu.pipeline_mode<synchronous>, transform_indices = @transform_2, window_bounds = array<i64: 512, 128>}, {transform_indices = @transform_3, window_bounds = array<i64: 16, 1>}, {transform_indices = @transform_4, window_bounds = array<i64: 16, 128>}]} {
    %c0_i32 = arith.constant 0 : i32
    %0 = arith.cmpi eq, %arg1, %c0_i32 : i32
    %1 = arith.extui %0 : i1 to i32
    %c0_i32_0 = arith.constant 0 : i32
    %2 = arith.cmpi ne, %1, %c0_i32_0 : i32
    scf.if %2 {
      %cst_10 = arith.constant 0.000000e+00 : f32
      %12 = vector.broadcast %cst_10 : f32 to vector<16x512xf32>
      %c0_11 = arith.constant 0 : index
      %c0_12 = arith.constant 0 : index
      %13 = vector.load %arg7[%c0_11, %c0_12] : memref<16x512xf32, #tpu.memory_space<vmem>>, vector<16x512xf32>
      tpu.vector_store %arg7[%c0_11, %c0_12], %12 {strides = array<i32>} : memref<16x512xf32, #tpu.memory_space<vmem>>, vector<16x512xf32>,
    } else {
    }
    %c0 = arith.constant 0 : index
    %c0_1 = arith.constant 0 : index
    %3 = vector.load %arg7[%c0, %c0_1] : memref<16x512xf32, #tpu.memory_space<vmem>>, vector<16x512xf32>
    %c0_2 = arith.constant 0 : index
    %c0_3 = arith.constant 0 : index
    %4 = vector.load %arg2[%c0_2, %c0_3] : memref<16x768xbf16, #tpu.memory_space<vmem>>, vector<16x768xbf16>
    %c0_4 = arith.constant 0 : index
    %c0_5 = arith.constant 0 : index
    %5 = vector.load %arg3[%c0_4, %c0_5] : memref<768x512xbf16, #tpu.memory_space<vmem>>, vector<768x512xbf16>
    %cst = arith.constant dense<0.000000e+00> : vector<16x512xf32>
    %6 = tpu.matmul %4, %5, %cst {dimension_numbers = #tpu.dot_dimension_numbers<[1], [0], [0], [1], [0, 0, 1, 1], [], []>} : vector<16x768xbf16>, vector<768x512xbf16>, vector<16x512xf32> -> vector<16x512xf32>
    %7 = arith.addf %3, %6 : vector<16x512xf32>
    %c0_6 = arith.constant 0 : index
    %c0_7 = arith.constant 0 : index
    %8 = vector.load %arg7[%c0_6, %c0_7] : memref<16x512xf32, #tpu.memory_space<vmem>>, vector<16x512xf32>
    tpu.vector_store %arg7[%c0_6, %c0_7], %7 {strides = array<i32>} : memref<16x512xf32, #tpu.memory_space<vmem>>, vector<16x512xf32>,
    %c0_i32_8 = arith.constant 0 : i32
    %9 = arith.cmpi eq, %arg1, %c0_i32_8 : i32
    %10 = arith.extui %9 : i1 to i32
    %c0_i32_9 = arith.constant 0 : i32
    %11 = arith.cmpi ne, %10, %c0_i32_9 : i32
    scf.if %11 {
      %c0_10 = arith.constant 0 : index
      %c0_11 = arith.constant 0 : index
      %12 = vector.load %arg7[%c0_10, %c0_11] : memref<16x512xf32, #tpu.memory_space<vmem>>, vector<16x512xf32>
      %13 = arith.mulf %12, %12 : vector<16x512xf32>
      %cst_12 = arith.constant dense<0.000000e+00> : vector<16xf32>
      %14 = vector.multi_reduction <add>, %13, %cst_12 [1] : vector<16x512xf32> to vector<16xf32>
      %15 = vector.shape_cast %14 : vector<16xf32> to vector<16x1xf32>
      %cst_13 = arith.constant 1.000000e-24 : f32
      %16 = vector.broadcast %cst_13 : f32 to vector<16x1xf32>
      %17 = arith.addf %15, %16 : vector<16x1xf32>
      %18 = math.rsqrt %17 : vector<16x1xf32>
      %19 = vector.broadcast %18 : vector<16x1xf32> to vector<16x512xf32>
      %20 = arith.mulf %12, %19 : vector<16x512xf32>
      %c0_14 = arith.constant 0 : index
      %c0_15 = arith.constant 0 : index
      %21 = vector.load %arg4[%c0_14, %c0_15] : memref<512x128xf32, #tpu.memory_space<vmem>>, vector<512x128xf32>
      %cst_16 = arith.constant dense<0.000000e+00> : vector<16x128xf32>
      %22 = tpu.matmul %20, %21, %cst_16 {dimension_numbers = #tpu.dot_dimension_numbers<[1], [0], [0], [1], [0, 0, 1, 1], [], []>} : vector<16x512xf32>, vector<512x128xf32>, vector<16x128xf32> -> vector<16x128xf32>
      %c0_17 = arith.constant 0 : index
      %c0_18 = arith.constant 0 : index
      %23 = vector.load %arg5[%c0_17, %c0_18] : memref<16x1xi32, #tpu.memory_space<vmem>>, vector<16x1xi32>
      %24 = tpu.iota {dimensions = array<i32: 1>} : vector<16x128xi32>
      %25 = vector.broadcast %23 : vector<16x1xi32> to vector<16x128xi32>
      %26 = arith.cmpi eq, %24, %25 : vector<16x128xi32>
      %27 = arith.extui %26 : vector<16x128xi1> to vector<16x128xi32>
      %28 = arith.sitofp %27 : vector<16x128xi32> to vector<16x128xf32>
      %29 = arith.mulf %22, %28 : vector<16x128xf32>
      %cst_19 = arith.constant dense<0.000000e+00> : vector<16xf32>
      %30 = vector.multi_reduction <add>, %29, %cst_19 [1] : vector<16x128xf32> to vector<16xf32>
      %31 = vector.shape_cast %30 : vector<16xf32> to vector<16x1xf32>
      %32 = arith.mulf %31, %31 : vector<16x1xf32>
      %cst_20 = arith.constant 1.000000e+00 : f32
      %33 = vector.broadcast %cst_20 : f32 to vector<16x1xf32>
      %34 = arith.subf %33, %32 : vector<16x1xf32>
      %cst_21 = arith.constant 0.000000e+00 : f32
      %35 = vector.broadcast %cst_21 : f32 to vector<16x1xf32>
      %36 = arith.maximumf %34, %35 : vector<16x1xf32>
      %37 = math.sqrt %36 : vector<16x1xf32>
      %cst_22 = arith.constant 0.621609985 : f32
      %38 = vector.broadcast %cst_22 : f32 to vector<16x1xf32>
      %39 = arith.mulf %31, %38 : vector<16x1xf32>
      %cst_23 = arith.constant 0.783326923 : f32
      %40 = vector.broadcast %cst_23 : f32 to vector<16x1xf32>
      %41 = arith.mulf %37, %40 : vector<16x1xf32>
      %42 = arith.subf %39, %41 : vector<16x1xf32>
      %43 = arith.subf %42, %31 : vector<16x1xf32>
      %44 = vector.broadcast %43 : vector<16x1xf32> to vector<16x128xf32>
      %45 = arith.mulf %28, %44 : vector<16x128xf32>
      %46 = arith.addf %22, %45 : vector<16x128xf32>
      %cst_24 = arith.constant 1.000000e+01 : f32
      %47 = vector.broadcast %cst_24 : f32 to vector<16x128xf32>
      %48 = arith.mulf %47, %46 : vector<16x128xf32>
      %c0_25 = arith.constant 0 : index
      %c0_26 = arith.constant 0 : index
      %49 = vector.load %arg6[%c0_25, %c0_26] : memref<16x128xf32, #tpu.memory_space<vmem>>, vector<16x128xf32>
      tpu.vector_store %arg6[%c0_25, %c0_26], %48 {strides = array<i32>} : memref<16x128xf32, #tpu.memory_space<vmem>>, vector<16x128xf32>,
    } else {
    }
    return
  }
  func.func @transform_0(%arg0: i32, %arg1: i32) -> (i32, i32) {
    %c0_i32 = arith.constant 0 : i32
    return %arg0, %arg1 : i32, i32
  }
  func.func @transform_1(%arg0: i32, %arg1: i32) -> (i32, i32) {
    %c0_i32 = arith.constant 0 : i32
    %c0_i32_0 = arith.constant 0 : i32
    return %arg1, %c0_i32 : i32, i32
  }
  func.func @transform_2(%arg0: i32, %arg1: i32) -> (i32, i32) {
    %c0_i32 = arith.constant 0 : i32
    %c0_i32_0 = arith.constant 0 : i32
    %c0_i32_1 = arith.constant 0 : i32
    return %c0_i32, %c0_i32_0 : i32, i32
  }
  func.func @transform_3(%arg0: i32, %arg1: i32) -> (i32, i32) {
    %c0_i32 = arith.constant 0 : i32
    %c0_i32_0 = arith.constant 0 : i32
    return %arg0, %c0_i32 : i32, i32
  }
  func.func @transform_4(%arg0: i32, %arg1: i32) -> (i32, i32) {
    %c0_i32 = arith.constant 0 : i32
    %c0_i32_0 = arith.constant 0 : i32
    return %arg0, %c0_i32 : i32, i32
  }
}

</mosaic_0001>

<llo_original>
// kernel: tpu_custom_call.1
$region0: #{tpu_custom_call.1}
  #allocation0 [shape = 'u32[]', space=smem, size = 0x4, offset = 0x4, fixed_abs, tag = 'smem constant byte address 0x4 - core index']
  #allocation1 [shape = 'u32[72,128]{1,0:T(1,128)}', space=vmem, size = 0x9000, scoped, tag = 'internal scratch']
  #allocation2 [shape = 'f32[16,512]{1,0:T(8,128)}', space=vmem, size = 0x8000, scoped, tag = 'scratch operand']
  %s0 = inlined_call_operand.hbm [shape: bf16[16,768], index: 0, kind: input, shape index: {}]
  %s1 = inlined_call_operand.hbm [shape: bf16[768,512], index: 1, kind: input, shape index: {}]
  %s2 = inlined_call_operand.hbm [shape: f32[512,128], index: 2, kind: input, shape index: {}]
  %s3 = inlined_call_operand.vmem [shape: s32[16,1], index: 3, kind: input, shape index: {}]
  %s4 = inlined_call_operand.hbm [shape: f32[16,128], index: 4, kind: output, shape index: {}]
  %s5 = sld [smem:[#allocation0]]
  $region46: #{tpu_custom_call.1} parent=0
    _
  %s7 = ssub.s32 1, %s5
  %s8 = scalar_select 0, %s7, %s5
  $region1: #{tpu_custom_call.1} parent=0
    #allocation3 [shape = 'u8[24576]{0}', space=vmem, size = 0x6000, scoped, tag = 'input window, operand 0, single buffered']
    #allocation4 [shape = 's32[1]{0}', space=sflag, size = 0x4, scoped, tag = 'scoped memory for tpu_custom_call.1']
    #allocation5 [shape = 's32[1]{0}', space=sflag, size = 0x4, scoped, tag = 'scoped memory for tpu_custom_call.1']
    #allocation6 [shape = 'u8[786432]{0}', space=vmem, size = 0xc0000, scoped, tag = 'input window, operand 1, single buffered']
    #allocation7 [shape = 's32[1]{0}', space=sflag, size = 0x4, scoped, tag = 'scoped memory for tpu_custom_call.1']
    #allocation8 [shape = 'u8[262144]{0}', space=vmem, size = 0x40000, scoped, tag = 'input window, operand 2, single buffered']
    #allocation9 [shape = 'u8[8192]{0}', space=vmem, size = 0x2000, scoped, tag = 'output window, operand 0, single buffered']
    %9 = vsyncpa [#allocation4], 0
    %10 = vsyncpa [#allocation7], 0
    %11 = vsyncpa [#allocation5], 0
    // Predicated region
    $region2: #{tpu_custom_call.1} parent=1 // pred_check
      _
    $region3: #{tpu_custom_call.1} parent=1 // pred_check_branch
      %13 = sbr.rel (0) target = $region5
    $region4: #{tpu_custom_call.1} parent=1 // pred_region
      %15 = vsyncadd [#allocation4], 0
      %s16 = sshll.u32 %s0, 4
      %s17 = int_to_ptr.hbm [resolvable:$true] %s16
      %s18 = sshll.u32 [#allocation3], 4
      %s19 = int_to_ptr.vmem [resolvable:$true] %s18
      %24 = dma.hbm_to_vmem [thread:$0]  %s17, 768, %s19, [#allocation4], 384, 384, 24
    $region5: #{tpu_custom_call.1} parent=1 // pred_fallthru
      _
    // Predicated region
    $region6: #{tpu_custom_call.1} parent=1 // pred_check
      _
    $region7: #{tpu_custom_call.1} parent=1 // pred_check_branch
      %26 = sbr.rel (0) target = $region9
    $region8: #{tpu_custom_call.1} parent=1 // pred_region
      %28 = vsyncadd [#allocation7], 0
      %s29 = sshll.u32 %s1, 4
      %s30 = int_to_ptr.hbm [resolvable:$true] %s29
      %s31 = sshll.u32 [#allocation6], 4
      %s32 = int_to_ptr.vmem [resolvable:$true] %s31
      %37 = dma.hbm_to_vmem [thread:$0]  %s30, 24576, %s32, [#allocation7], 256, 256, 16
    $region9: #{tpu_custom_call.1} parent=1 // pred_fallthru
      _
    // Predicated region
    $region10: #{tpu_custom_call.1} parent=1 // pred_check
      _
    $region11: #{tpu_custom_call.1} parent=1 // pred_check_branch
      %39 = sbr.rel (0) target = $region13
    $region12: #{tpu_custom_call.1} parent=1 // pred_region
      %41 = vsyncadd [#allocation7], 0
      %s42 = sshll.u32 %s2, 4
      %s43 = int_to_ptr.hbm [resolvable:$true] %s42
      %s44 = sshll.u32 [#allocation8], 4
      %s45 = int_to_ptr.vmem [resolvable:$true] %s44
      %50 = dma.hbm_to_vmem [thread:$0]  %s43, 8192, %s45, [#allocation7], 128, 128, 8
    $region13: #{tpu_custom_call.1} parent=1 // pred_fallthru
      _
    // Predicated region
    $region14: #{tpu_custom_call.1} parent=1 // pred_check
      _
    $region15: #{tpu_custom_call.1} parent=1 // pred_check_branch
      %52 = sbr.rel (0) target = $region17
    $region16: #{tpu_custom_call.1} parent=1 // pred_region
      _
    $region17: #{tpu_custom_call.1} parent=1 // pred_fallthru
      _
    // Predicated region
    $region18: #{tpu_custom_call.1} parent=1 // pred_check
      _
    $region19: #{tpu_custom_call.1} parent=1 // pred_check_branch
      %54 = sbr.rel (0) target = $region21
    $region20: #{tpu_custom_call.1} parent=1 // pred_region
      %56 = dma.done [#allocation4], 768
    $region21: #{tpu_custom_call.1} parent=1 // pred_fallthru
      _
    // Predicated region
    $region22: #{tpu_custom_call.1} parent=1 // pred_check
      _
    $region23: #{tpu_custom_call.1} parent=1 // pred_check_branch
      %58 = sbr.rel (0) target = $region25
    $region24: #{tpu_custom_call.1} parent=1 // pred_region
      %60 = dma.done [#allocation7], 24576
    $region25: #{tpu_custom_call.1} parent=1 // pred_fallthru
      _
    // Predicated region
    $region26: #{tpu_custom_call.1} parent=1 // pred_check
      _
    $region27: #{tpu_custom_call.1} parent=1 // pred_check_branch
      %62 = sbr.rel (0) target = $region29
    $region28: #{tpu_custom_call.1} parent=1 // pred_region
      %64 = dma.done [#allocation7], 8192
    $region29: #{tpu_custom_call.1} parent=1 // pred_fallthru
      _
    %p65 = scmp.eq.s32.totalorder 0, 0
    // Predicated region
    $region30: #{tpu_custom_call.1} parent=1 // pred_check
      %p66 = pneg %p65
    $region31: #{tpu_custom_call.1} parent=1 // pred_check_branch
      %68 = sbr.rel (%p66) target = $region33
    $region32: #{tpu_custom_call.1} parent=1 // pred_region
      %69 = vst [vmem:[#allocation2] sm:$0xff] 0.0
      %70 = vst [vmem:[#allocation2 + $0x8] sm:$0xff] 0.0
      %71 = vst [vmem:[#allocation2 + $0x10] sm:$0xff] 0.0
      %72 = vst [vmem:[#allocation2 + $0x18] sm:$0xff] 0.0
      %73 = vst [vmem:[#allocation2 + $0x20] sm:$0xff] 0.0
      %74 = vst [vmem:[#allocation2 + $0x28] sm:$0xff] 0.0
      %75 = vst [vmem:[#allocation2 + $0x30] sm:$0xff] 0.0
      %76 = vst [vmem:[#allocation2 + $0x38] sm:$0xff] 0.0
    $region33: #{tpu_custom_call.1} parent=1 // pred_fallthru
      _
    %v77 = vld [vmem:[#allocation2] sm:$0xff]
    %v78 = vld [vmem:[#allocation2 + $0x8] sm:$0xff]
    %v79 = vld [vmem:[#allocation2 + $0x10] sm:$0xff]
    %v80 = vld [vmem:[#allocation2 + $0x18] sm:$0xff]
    %v81 = vld [vmem:[#allocation2 + $0x20] sm:$0xff]
    %v82 = vld [vmem:[#allocation2 + $0x28] sm:$0xff]
    %v83 = vld [vmem:[#allocation2 + $0x30] sm:$0xff]
    %v84 = vld [vmem:[#allocation2 + $0x38] sm:$0xff]
    %v85 = vld [vmem:[#allocation3] sm:$0xff]
    %v86 = vld [vmem:[#allocation3 + $0x8] sm:$0xff]
    %v87 = vld [vmem:[#allocation3 + $0x10] sm:$0xff]
    %v88 = vld [vmem:[#allocation3 + $0x18] sm:$0xff]
    %v89 = vld [vmem:[#allocation3 + $0x20] sm:$0xff]
    %v90 = vld [vmem:[#allocation3 + $0x28] sm:$0xff]
    %v91 = vld [vmem:[#allocation6] sm:$0xff]
    %v92 = vld [vmem:[#allocation6 + $0x8] sm:$0xff]
    %v93 = vld [vmem:[#allocation6 + $0x10] sm:$0xff]
    %v94 = vld [vmem:[#allocation6 + $0x18] sm:$0xff]
    %v95 = vld [vmem:[#allocation6 + $0x20] sm:$0xff]
    %v96 = vld [vmem:[#allocation6 + $0x28] sm:$0xff]
    %v97 = vld [vmem:[#allocation6 + $0x30] sm:$0xff]
    %v98 = vld [vmem:[#allocation6 + $0x38] sm:$0xff]
    %v99 = vld [vmem:[#allocation6 + $0x40] sm:$0xff]
    %v100 = vld [vmem:[#allocation6 + $0x48] sm:$0xff]
    %v101 = vld [vmem:[#allocation6 + $0x50] sm:$0xff]
    %v102 = vld [vmem:[#allocation6 + $0x58] sm:$0xff]
    %v103 = vld [vmem:[#allocation6 + $0x60] sm:$0xff]
    %v104 = vld [vmem:[#allocation6 + $0x68] sm:$0xff]
    %v105 = vld [vmem:[#allocation6 + $0x70] sm:$0xff]
    %v106 = vld [vmem:[#allocation6 + $0x78] sm:$0xff]
    %v107 = vld [vmem:[#allocation6 + $0x80] sm:$0xff]
    %v108 = vld [vmem:[#allocation6 + $0x88] sm:$0xff]
    %v109 = vld [vmem:[#allocation6 + $0x90] sm:$0xff]
    %v110 = vld [vmem:[#allocation6 + $0x98] sm:$0xff]
    %v111 = vld [vmem:[#allocation6 + $0xa0] sm:$0xff]
    %v112 = vld [vmem:[#allocation6 + $0xa8] sm:$0xff]
    %v113 = vld [vmem:[#allocation6 + $0xb0] sm:$0xff]
    %v114 = vld [vmem:[#allocation6 + $0xb8] sm:$0xff]
    %v115 = vld [vmem:[#allocation6 + $0xc0] sm:$0xff]
    %v116 = vld [vmem:[#allocation6 + $0xc8] sm:$0xff]
    %v117 = vld [vmem:[#allocation6 + $0xd0] sm:$0xff]
    %v118 = vld [vmem:[#allocation6 + $0xd8] sm:$0xff]
    %v119 = vld [vmem:[#allocation6 + $0xe0] sm:$0xff]
    %v120 = vld [vmem:[#allocation6 + $0xe8] sm:$0xff]
    %v121 = vld [vmem:[#allocation6 + $0xf0] sm:$0xff]
    %v122 = vld [vmem:[#allocation6 + $0xf8] sm:$0xff]
    %v123 = vld [vmem:[#allocation6 + $0x100] sm:$0xff]
    %v124 = vld [vmem:[#allocation6 + $0x108] sm:$0xff]
    %v125 = vld [vmem:[#allocation6 + $0x110] sm:$0xff]
    %v126 = vld [vmem:[#allocation6 + $0x118] sm:$0xff]
    %v127 = vld [vmem:[#allocation6 + $0x120] sm:$0xff]
    %v128 = vld [vmem:[#allocation6 + $0x128] sm:$0xff]
    %v129 = vld [vmem:[#allocation6 + $0x130] sm:$0xff]
    %v130 = vld [vmem:[#allocation6 + $0x138] sm:$0xff]
    %v131 = vld [vmem:[#allocation6 + $0x140] sm:$0xff]
    %v132 = vld [vmem:[#allocation6 + $0x148] sm:$0xff]
    %v133 = vld [vmem:[#allocation6 + $0x150] sm:$0xff]
    %v134 = vld [vmem:[#allocation6 + $0x158] sm:$0xff]
    %v135 = vld [vmem:[#allocation6 + $0x160] sm:$0xff]
    %v136 = vld [vmem:[#allocation6 + $0x168] sm:$0xff]
    %v137 = vld [vmem:[#allocation6 + $0x170] sm:$0xff]
    %v138 = vld [vmem:[#allocation6 + $0x178] sm:$0xff]
    %v139 = vld [vmem:[#allocation6 + $0x180] sm:$0xff]
    %v140 = vld [vmem:[#allocation6 + $0x188] sm:$0xff]
    %v141 = vld [vmem:[#allocation6 + $0x190] sm:$0xff]
    %v142 = vld [vmem:[#allocation6 + $0x198] sm:$0xff]
    %v143 = vld [vmem:[#allocation6 + $0x1a0] sm:$0xff]
    %v144 = vld [vmem:[#allocation6 + $0x1a8] sm:$0xff]
    %v145 = vld [vmem:[#allocation6 + $0x1b0] sm:$0xff]
    %v146 = vld [vmem:[#allocation6 + $0x1b8] sm:$0xff]
    %v147 = vld [vmem:[#allocation6 + $0x1c0] sm:$0xff]
    %v148 = vld [vmem:[#allocation6 + $0x1c8] sm:$0xff]
    %v149 = vld [vmem:[#allocation6 + $0x1d0] sm:$0xff]
    %v150 = vld [vmem:[#allocation6 + $0x1d8] sm:$0xff]
    %v151 = vld [vmem:[#allocation6 + $0x1e0] sm:$0xff]
    %v152 = vld [vmem:[#allocation6 + $0x1e8] sm:$0xff]
    %v153 = vld [vmem:[#allocation6 + $0x1f0] sm:$0xff]
    %v154 = vld [vmem:[#allocation6 + $0x1f8] sm:$0xff]
    %v155 = vld [vmem:[#allocation6 + $0x200] sm:$0xff]
    %v156 = vld [vmem:[#allocation6 + $0x208] sm:$0xff]
    %v157 = vld [vmem:[#allocation6 + $0x210] sm:$0xff]
    %v158 = vld [vmem:[#allocation6 + $0x218] sm:$0xff]
    %v159 = vld [vmem:[#allocation6 + $0x220] sm:$0xff]
    %v160 = vld [vmem:[#allocation6 + $0x228] sm:$0xff]
    %v161 = vld [vmem:[#allocation6 + $0x230] sm:$0xff]
    %v162 = vld [vmem:[#allocation6 + $0x238] sm:$0xff]
    %v163 = vld [vmem:[#allocation6 + $0x240] sm:$0xff]
    %v164 = vld [vmem:[#allocation6 + $0x248] sm:$0xff]
    %v165 = vld [vmem:[#allocation6 + $0x250] sm:$0xff]
    %v166 = vld [vmem:[#allocation6 + $0x258] sm:$0xff]
    %v167 = vld [vmem:[#allocation6 + $0x260] sm:$0xff]
    %v168 = vld [vmem:[#allocation6 + $0x268] sm:$0xff]
    %v169 = vld [vmem:[#allocation6 + $0x270] sm:$0xff]
    %v170 = vld [vmem:[#allocation6 + $0x278] sm:$0xff]
    %v171 = vld [vmem:[#allocation6 + $0x280] sm:$0xff]
    %v172 = vld [vmem:[#allocation6 + $0x288] sm:$0xff]
    %v173 = vld [vmem:[#allocation6 + $0x290] sm:$0xff]
    %v174 = vld [vmem:[#allocation6 + $0x298] sm:$0xff]
    %v175 = vld [vmem:[#allocation6 + $0x2a0] sm:$0xff]
    %v176 = vld [vmem:[#allocation6 + $0x2a8] sm:$0xff]
    %v177 = vld [vmem:[#allocation6 + $0x2b0] sm:$0xff]
    %v178 = vld [vmem:[#allocation6 + $0x2b8] sm:$0xff]
    %v179 = vld [vmem:[#allocation6 + $0x2c0] sm:$0xff]
    %v180 = vld [vmem:[#allocation6 + $0x2c8] sm:$0xff]
    %v181 = vld [vmem:[#allocation6 + $0x2d0] sm:$0xff]
    %v182 = vld [vmem:[#allocation6 + $0x2d8] sm:$0xff]
    %v183 = vld [vmem:[#allocation6 + $0x2e0] sm:$0xff]
    %v184 = vld [vmem:[#allocation6 + $0x2e8] sm:$0xff]
    %v185 = vld [vmem:[#allocation6 + $0x2f0] sm:$0xff]
    %v186 = vld [vmem:[#allocation6 + $0x2f8] sm:$0xff]
    %v187 = vld [vmem:[#allocation6 + $0x300] sm:$0xff]
    %v188 = vld [vmem:[#allocation6 + $0x308] sm:$0xff]
    %v189 = vld [vmem:[#allocation6 + $0x310] sm:$0xff]
    %v190 = vld [vmem:[#allocation6 + $0x318] sm:$0xff]
    %v191 = vld [vmem:[#allocation6 + $0x320] sm:$0xff]
    %v192 = vld [vmem:[#allocation6 + $0x328] sm:$0xff]
    %v193 = vld [vmem:[#allocation6 + $0x330] sm:$0xff]
    %v194 = vld [vmem:[#allocation6 + $0x338] sm:$0xff]
    %v195 = vld [vmem:[#allocation6 + $0x340] sm:$0xff]
    %v196 = vld [vmem:[#allocation6 + $0x348] sm:$0xff]
    %v197 = vld [vmem:[#allocation6 + $0x350] sm:$0xff]
    %v198 = vld [vmem:[#allocation6 + $0x358] sm:$0xff]
    %v199 = vld [vmem:[#allocation6 + $0x360] sm:$0xff]
    %v200 = vld [vmem:[#allocation6 + $0x368] sm:$0xff]
    %v201 = vld [vmem:[#allocation6 + $0x370] sm:$0xff]
    %v202 = vld [vmem:[#allocation6 + $0x378] sm:$0xff]
    %v203 = vld [vmem:[#allocation6 + $0x380] sm:$0xff]
    %v204 = vld [vmem:[#allocation6 + $0x388] sm:$0xff]
    %v205 = vld [vmem:[#allocation6 + $0x390] sm:$0xff]
    %v206 = vld [vmem:[#allocation6 + $0x398] sm:$0xff]
    %v207 = vld [vmem:[#allocation6 + $0x3a0] sm:$0xff]
    %v208 = vld [vmem:[#allocation6 + $0x3a8] sm:$0xff]
    %v209 = vld [vmem:[#allocation6 + $0x3b0] sm:$0xff]
    %v210 = vld [vmem:[#allocation6 + $0x3b8] sm:$0xff]
    %v211 = vld [vmem:[#allocation6 + $0x3c0] sm:$0xff]
    %v212 = vld [vmem:[#allocation6 + $0x3c8] sm:$0xff]
    %v213 = vld [vmem:[#allocation6 + $0x3d0] sm:$0xff]
    %v214 = vld [vmem:[#allocation6 + $0x3d8] sm:$0xff]
    %v215 = vld [vmem:[#allocation6 + $0x3e0] sm:$0xff]
    %v216 = vld [vmem:[#allocation6 + $0x3e8] sm:$0xff]
    %v217 = vld [vmem:[#allocation6 + $0x3f0] sm:$0xff]
    %v218 = vld [vmem:[#allocation6 + $0x3f8] sm:$0xff]
    %v219 = vld [vmem:[#allocation6 + $0x400] sm:$0xff]
    %v220 = vld [vmem:[#allocation6 + $0x408] sm:$0xff]
    %v221 = vld [vmem:[#allocation6 + $0x410] sm:$0xff]
    %v222 = vld [vmem:[#allocation6 + $0x418] sm:$0xff]
    %v223 = vld [vmem:[#allocation6 + $0x420] sm:$0xff]
    %v224 = vld [vmem:[#allocation6 + $0x428] sm:$0xff]
    %v225 = vld [vmem:[#allocation6 + $0x430] sm:$0xff]
    %v226 = vld [vmem:[#allocation6 + $0x438] sm:$0xff]
    %v227 = vld [vmem:[#allocation6 + $0x440] sm:$0xff]
    %v228 = vld [vmem:[#allocation6 + $0x448] sm:$0xff]
    %v229 = vld [vmem:[#allocation6 + $0x450] sm:$0xff]
    %v230 = vld [vmem:[#allocation6 + $0x458] sm:$0xff]
    %v231 = vld [vmem:[#allocation6 + $0x460] sm:$0xff]
    %v232 = vld [vmem:[#allocation6 + $0x468] sm:$0xff]
    %v233 = vld [vmem:[#allocation6 + $0x470] sm:$0xff]
    %v234 = vld [vmem:[#allocation6 + $0x478] sm:$0xff]
    %v235 = vld [vmem:[#allocation6 + $0x480] sm:$0xff]
    %v236 = vld [vmem:[#allocation6 + $0x488] sm:$0xff]
    %v237 = vld [vmem:[#allocation6 + $0x490] sm:$0xff]
    %v238 = vld [vmem:[#allocation6 + $0x498] sm:$0xff]
    %v239 = vld [vmem:[#allocation6 + $0x4a0] sm:$0xff]
    %v240 = vld [vmem:[#allocation6 + $0x4a8] sm:$0xff]
    %v241 = vld [vmem:[#allocation6 + $0x4b0] sm:$0xff]
    %v242 = vld [vmem:[#allocation6 + $0x4b8] sm:$0xff]
    %v243 = vld [vmem:[#allocation6 + $0x4c0] sm:$0xff]
    %v244 = vld [vmem:[#allocation6 + $0x4c8] sm:$0xff]
    %v245 = vld [vmem:[#allocation6 + $0x4d0] sm:$0xff]
    %v246 = vld [vmem:[#allocation6 + $0x4d8] sm:$0xff]
    %v247 = vld [vmem:[#allocation6 + $0x4e0] sm:$0xff]
    %v248 = vld [vmem:[#allocation6 + $0x4e8] sm:$0xff]
    %v249 = vld [vmem:[#allocation6 + $0x4f0] sm:$0xff]
    %v250 = vld [vmem:[#allocation6 + $0x4f8] sm:$0xff]
    %v251 = vld [vmem:[#allocation6 + $0x500] sm:$0xff]
    %v252 = vld [vmem:[#allocation6 + $0x508] sm:$0xff]
    %v253 = vld [vmem:[#allocation6 + $0x510] sm:$0xff]
    %v254 = vld [vmem:[#allocation6 + $0x518] sm:$0xff]
    %v255 = vld [vmem:[#allocation6 + $0x520] sm:$0xff]
    %v256 = vld [vmem:[#allocation6 + $0x528] sm:$0xff]
    %v257 = vld [vmem:[#allocation6 + $0x530] sm:$0xff]
    %v258 = vld [vmem:[#allocation6 + $0x538] sm:$0xff]
    %v259 = vld [vmem:[#allocation6 + $0x540] sm:$0xff]
    %v260 = vld [vmem:[#allocation6 + $0x548] sm:$0xff]
    %v261 = vld [vmem:[#allocation6 + $0x550] sm:$0xff]
    %v262 = vld [vmem:[#allocation6 + $0x558] sm:$0xff]
    %v263 = vld [vmem:[#allocation6 + $0x560] sm:$0xff]
    %v264 = vld [vmem:[#allocation6 + $0x568] sm:$0xff]
    %v265 = vld [vmem:[#allocation6 + $0x570] sm:$0xff]
    %v266 = vld [vmem:[#allocation6 + $0x578] sm:$0xff]
    %v267 = vld [vmem:[#allocation6 + $0x580] sm:$0xff]
    %v268 = vld [vmem:[#allocation6 + $0x588] sm:$0xff]
    %v269 = vld [vmem:[#allocation6 + $0x590] sm:$0xff]
    %v270 = vld [vmem:[#allocation6 + $0x598] sm:$0xff]
    %v271 = vld [vmem:[#allocation6 + $0x5a0] sm:$0xff]
    %v272 = vld [vmem:[#allocation6 + $0x5a8] sm:$0xff]
    %v273 = vld [vmem:[#allocation6 + $0x5b0] sm:$0xff]
    %v274 = vld [vmem:[#allocation6 + $0x5b8] sm:$0xff]
    %v275 = vld [vmem:[#allocation6 + $0x5c0] sm:$0xff]
    %v276 = vld [vmem:[#allocation6 + $0x5c8] sm:$0xff]
    %v277 = vld [vmem:[#allocation6 + $0x5d0] sm:$0xff]
    %v278 = vld [vmem:[#allocation6 + $0x5d8] sm:$0xff]
    %v279 = vld [vmem:[#allocation6 + $0x5e0] sm:$0xff]
    %v280 = vld [vmem:[#allocation6 + $0x5e8] sm:$0xff]
    %v281 = vld [vmem:[#allocation6 + $0x5f0] sm:$0xff]
    %v282 = vld [vmem:[#allocation6 + $0x5f8] sm:$0xff]
    %v289 = vunpack.c.l.b16 %v85
    %v290 = vunpack.c.h.b16 %v85
    %v291 = vunpack.c.l.b16 %v86
    %v292 = vunpack.c.h.b16 %v86
    %v293 = vunpack.c.l.b16 %v87
    %v294 = vunpack.c.h.b16 %v87
    %v295 = vunpack.c.l.b16 %v88
    %v296 = vunpack.c.h.b16 %v88
    %v297 = vunpack.c.l.b16 %v89
    %v298 = vunpack.c.h.b16 %v89
    %v299 = vunpack.c.l.b16 %v90
    %v300 = vunpack.c.h.b16 %v90
    %v301 = vpack.c.b16 %v295, %v289
    %v302 = vpack.c.b16 %v296, %v290
    %v303 = vpack.c.b16 %v297, %v291
    %v304 = vpack.c.b16 %v298, %v292
    %v305 = vpack.c.b16 %v299, %v293
    %v306 = vpack.c.b16 %v300, %v294
    %v505 = vunpack.c.l.b16 %v91
    %v506 = vunpack.c.h.b16 %v91
    %v507 = vunpack.c.l.b16 %v92
    %v508 = vunpack.c.h.b16 %v92
    %v509 = vunpack.c.l.b16 %v93
    %v510 = vunpack.c.h.b16 %v93
    %v511 = vunpack.c.l.b16 %v94
    %v512 = vunpack.c.h.b16 %v94
    %v513 = vunpack.c.l.b16 %v95
    %v514 = vunpack.c.h.b16 %v95
    %v515 = vunpack.c.l.b16 %v96
    %v516 = vunpack.c.h.b16 %v96
    %v517 = vunpack.c.l.b16 %v97
    %v518 = vunpack.c.h.b16 %v97
    %v519 = vunpack.c.l.b16 %v98
    %v520 = vunpack.c.h.b16 %v98
    %v521 = vunpack.c.l.b16 %v99
    %v522 = vunpack.c.h.b16 %v99
    %v523 = vunpack.c.l.b16 %v100
    %v524 = vunpack.c.h.b16 %v100
    %v525 = vunpack.c.l.b16 %v101
    %v526 = vunpack.c.h.b16 %v101
    %v527 = vunpack.c.l.b16 %v102
    %v528 = vunpack.c.h.b16 %v102
    %v529 = vunpack.c.l.b16 %v103
    %v530 = vunpack.c.h.b16 %v103
    %v531 = vunpack.c.l.b16 %v104
    %v532 = vunpack.c.h.b16 %v104
    %v533 = vunpack.c.l.b16 %v105
    %v534 = vunpack.c.h.b16 %v105
    %v535 = vunpack.c.l.b16 %v106
    %v536 = vunpack.c.h.b16 %v106
    %v537 = vunpack.c.l.b16 %v107
    %v538 = vunpack.c.h.b16 %v107
    %v539 = vunpack.c.l.b16 %v108
    %v540 = vunpack.c.h.b16 %v108
    %v541 = vunpack.c.l.b16 %v109
    %v542 = vunpack.c.h.b16 %v109
    %v543 = vunpack.c.l.b16 %v110
    %v544 = vunpack.c.h.b16 %v110
    %v545 = vunpack.c.l.b16 %v111
    %v546 = vunpack.c.h.b16 %v111
    %v547 = vunpack.c.l.b16 %v112
    %v548 = vunpack.c.h.b16 %v112
    %v549 = vunpack.c.l.b16 %v113
    %v550 = vunpack.c.h.b16 %v113
    %v551 = vunpack.c.l.b16 %v114
    %v552 = vunpack.c.h.b16 %v114
    %v553 = vunpack.c.l.b16 %v115
    %v554 = vunpack.c.h.b16 %v115
    %v555 = vunpack.c.l.b16 %v116
    %v556 = vunpack.c.h.b16 %v116
    %v557 = vunpack.c.l.b16 %v117
    %v558 = vunpack.c.h.b16 %v117
    %v559 = vunpack.c.l.b16 %v118
    %v560 = vunpack.c.h.b16 %v118
    %v561 = vunpack.c.l.b16 %v119
    %v562 = vunpack.c.h.b16 %v119
    %v563 = vunpack.c.l.b16 %v120
    %v564 = vunpack.c.h.b16 %v120
    %v565 = vunpack.c.l.b16 %v121
    %v566 = vunpack.c.h.b16 %v121
    %v567 = vunpack.c.l.b16 %v122
    %v568 = vunpack.c.h.b16 %v122
    %v569 = vunpack.c.l.b16 %v123
    %v570 = vunpack.c.h.b16 %v123
    %v571 = vunpack.c.l.b16 %v124
    %v572 = vunpack.c.h.b16 %v124
    %v573 = vunpack.c.l.b16 %v125
    %v574 = vunpack.c.h.b16 %v125
    %v575 = vunpack.c.l.b16 %v126
    %v576 = vunpack.c.h.b16 %v126
    %v577 = vunpack.c.l.b16 %v127
    %v578 = vunpack.c.h.b16 %v127
    %v579 = vunpack.c.l.b16 %v128
    %v580 = vunpack.c.h.b16 %v128
    %v581 = vunpack.c.l.b16 %v129
    %v582 = vunpack.c.h.b16 %v129
    %v583 = vunpack.c.l.b16 %v130
    %v584 = vunpack.c.h.b16 %v130
    %v585 = vunpack.c.l.b16 %v131
    %v586 = vunpack.c.h.b16 %v131
    %v587 = vunpack.c.l.b16 %v132
    %v588 = vunpack.c.h.b16 %v132
    %v589 = vunpack.c.l.b16 %v133
    %v590 = vunpack.c.h.b16 %v133
    %v591 = vunpack.c.l.b16 %v134
    %v592 = vunpack.c.h.b16 %v134
    %v593 = vunpack.c.l.b16 %v135
    %v594 = vunpack.c.h.b16 %v135
    %v595 = vunpack.c.l.b16 %v136
    %v596 = vunpack.c.h.b16 %v136
    %v597 = vunpack.c.l.b16 %v137
    %v598 = vunpack.c.h.b16 %v137
    %v599 = vunpack.c.l.b16 %v138
    %v600 = vunpack.c.h.b16 %v138
    %v601 = vunpack.c.l.b16 %v139
    %v602 = vunpack.c.h.b16 %v139
    %v603 = vunpack.c.l.b16 %v140
    %v604 = vunpack.c.h.b16 %v140
    %v605 = vunpack.c.l.b16 %v141
    %v606 = vunpack.c.h.b16 %v141
    %v607 = vunpack.c.l.b16 %v142
    %v608 = vunpack.c.h.b16 %v142
    %v609 = vunpack.c.l.b16 %v143
    %v610 = vunpack.c.h.b16 %v143
    %v611 = vunpack.c.l.b16 %v144
    %v612 = vunpack.c.h.b16 %v144
    %v613 = vunpack.c.l.b16 %v145
    %v614 = vunpack.c.h.b16 %v145
    %v615 = vunpack.c.l.b16 %v146
    %v616 = vunpack.c.h.b16 %v146
    %v617 = vunpack.c.l.b16 %v147
    %v618 = vunpack.c.h.b16 %v147
    %v619 = vunpack.c.l.b16 %v148
    %v620 = vunpack.c.h.b16 %v148
    %v621 = vunpack.c.l.b16 %v149
    %v622 = vunpack.c.h.b16 %v149
    %v623 = vunpack.c.l.b16 %v150
    %v624 = vunpack.c.h.b16 %v150
    %v625 = vunpack.c.l.b16 %v151
    %v626 = vunpack.c.h.b16 %v151
    %v627 = vunpack.c.l.b16 %v152
    %v628 = vunpack.c.h.b16 %v152
    %v629 = vunpack.c.l.b16 %v153
    %v630 = vunpack.c.h.b16 %v153
    %v631 = vunpack.c.l.b16 %v154
    %v632 = vunpack.c.h.b16 %v154
    %v633 = vunpack.c.l.b16 %v155
    %v634 = vunpack.c.h.b16 %v155
    %v635 = vunpack.c.l.b16 %v156
    %v636 = vunpack.c.h.b16 %v156
    %v637 = vunpack.c.l.b16 %v157
    %v638 = vunpack.c.h.b16 %v157
    %v639 = vunpack.c.l.b16 %v158
    %v640 = vunpack.c.h.b16 %v158
    %v641 = vunpack.c.l.b16 %v159
    %v642 = vunpack.c.h.b16 %v159
    %v643 = vunpack.c.l.b16 %v160
    %v644 = vunpack.c.h.b16 %v160
    %v645 = vunpack.c.l.b16 %v161
    %v646 = vunpack.c.h.b16 %v161
    %v647 = vunpack.c.l.b16 %v162
    %v648 = vunpack.c.h.b16 %v162
    %v649 = vunpack.c.l.b16 %v163
    %v650 = vunpack.c.h.b16 %v163
    %v651 = vunpack.c.l.b16 %v164
    %v652 = vunpack.c.h.b16 %v164
    %v653 = vunpack.c.l.b16 %v165
    %v654 = vunpack.c.h.b16 %v165
    %v655 = vunpack.c.l.b16 %v166
    %v656 = vunpack.c.h.b16 %v166
    %v657 = vunpack.c.l.b16 %v167
    %v658 = vunpack.c.h.b16 %v167
    %v659 = vunpack.c.l.b16 %v168
    %v660 = vunpack.c.h.b16 %v168
    %v661 = vunpack.c.l.b16 %v169
    %v662 = vunpack.c.h.b16 %v169
    %v663 = vunpack.c.l.b16 %v170
    %v664 = vunpack.c.h.b16 %v170
    %v665 = vunpack.c.l.b16 %v171
    %v666 = vunpack.c.h.b16 %v171
    %v667 = vunpack.c.l.b16 %v172
    %v668 = vunpack.c.h.b16 %v172
    %v669 = vunpack.c.l.b16 %v173
    %v670 = vunpack.c.h.b16 %v173
    %v671 = vunpack.c.l.b16 %v174
    %v672 = vunpack.c.h.b16 %v174
    %v673 = vunpack.c.l.b16 %v175
    %v674 = vunpack.c.h.b16 %v175
    %v675 = vunpack.c.l.b16 %v176
    %v676 = vunpack.c.h.b16 %v176
    %v677 = vunpack.c.l.b16 %v177
    %v678 = vunpack.c.h.b16 %v177
    %v679 = vunpack.c.l.b16 %v178
    %v680 = vunpack.c.h.b16 %v178
    %v681 = vunpack.c.l.b16 %v179
    %v682 = vunpack.c.h.b16 %v179
    %v683 = vunpack.c.l.b16 %v180
    %v684 = vunpack.c.h.b16 %v180
    %v685 = vunpack.c.l.b16 %v181
    %v686 = vunpack.c.h.b16 %v181
    %v687 = vunpack.c.l.b16 %v182
    %v688 = vunpack.c.h.b16 %v182
    %v689 = vunpack.c.l.b16 %v183
    %v690 = vunpack.c.h.b16 %v183
    %v691 = vunpack.c.l.b16 %v184
    %v692 = vunpack.c.h.b16 %v184
    %v693 = vunpack.c.l.b16 %v185
    %v694 = vunpack.c.h.b16 %v185
    %v695 = vunpack.c.l.b16 %v186
    %v696 = vunpack.c.h.b16 %v186
    %v697 = vunpack.c.l.b16 %v187
    %v698 = vunpack.c.h.b16 %v187
    %v699 = vunpack.c.l.b16 %v188
    %v700 = vunpack.c.h.b16 %v188
    %v701 = vunpack.c.l.b16 %v189
    %v702 = vunpack.c.h.b16 %v189
    %v703 = vunpack.c.l.b16 %v190
    %v704 = vunpack.c.h.b16 %v190
    %v705 = vunpack.c.l.b16 %v191
    %v706 = vunpack.c.h.b16 %v191
    %v707 = vunpack.c.l.b16 %v192
    %v708 = vunpack.c.h.b16 %v192
    %v709 = vunpack.c.l.b16 %v193
    %v710 = vunpack.c.h.b16 %v193
    %v711 = vunpack.c.l.b16 %v194
    %v712 = vunpack.c.h.b16 %v194
    %v713 = vunpack.c.l.b16 %v195
    %v714 = vunpack.c.h.b16 %v195
    %v715 = vunpack.c.l.b16 %v196
    %v716 = vunpack.c.h.b16 %v196
    %v717 = vunpack.c.l.b16 %v197
    %v718 = vunpack.c.h.b16 %v197
    %v719 = vunpack.c.l.b16 %v198
    %v720 = vunpack.c.h.b16 %v198
    %v721 = vunpack.c.l.b16 %v199
    %v722 = vunpack.c.h.b16 %v199
    %v723 = vunpack.c.l.b16 %v200
    %v724 = vunpack.c.h.b16 %v200
    %v725 = vunpack.c.l.b16 %v201
    %v726 = vunpack.c.h.b16 %v201
    %v727 = vunpack.c.l.b16 %v202
    %v728 = vunpack.c.h.b16 %v202
    %v729 = vunpack.c.l.b16 %v203
    %v730 = vunpack.c.h.b16 %v203
    %v731 = vunpack.c.l.b16 %v204
    %v732 = vunpack.c.h.b16 %v204
    %v733 = vunpack.c.l.b16 %v205
    %v734 = vunpack.c.h.b16 %v205
    %v735 = vunpack.c.l.b16 %v206
    %v736 = vunpack.c.h.b16 %v206
    %v737 = vunpack.c.l.b16 %v207
    %v738 = vunpack.c.h.b16 %v207
    %v739 = vunpack.c.l.b16 %v208
    %v740 = vunpack.c.h.b16 %v208
    %v741 = vunpack.c.l.b16 %v209
    %v742 = vunpack.c.h.b16 %v209
    %v743 = vunpack.c.l.b16 %v210
    %v744 = vunpack.c.h.b16 %v210
    %v745 = vunpack.c.l.b16 %v211
    %v746 = vunpack.c.h.b16 %v211
    %v747 = vunpack.c.l.b16 %v212
    %v748 = vunpack.c.h.b16 %v212
    %v749 = vunpack.c.l.b16 %v213
    %v750 = vunpack.c.h.b16 %v213
    %v751 = vunpack.c.l.b16 %v214
    %v752 = vunpack.c.h.b16 %v214
    %v753 = vunpack.c.l.b16 %v215
    %v754 = vunpack.c.h.b16 %v215
    %v755 = vunpack.c.l.b16 %v216
    %v756 = vunpack.c.h.b16 %v216
    %v757 = vunpack.c.l.b16 %v217
    %v758 = vunpack.c.h.b16 %v217
    %v759 = vunpack.c.l.b16 %v218
    %v760 = vunpack.c.h.b16 %v218
    %v761 = vunpack.c.l.b16 %v219
    %v762 = vunpack.c.h.b16 %v219
    %v763 = vunpack.c.l.b16 %v220
    %v764 = vunpack.c.h.b16 %v220
    %v765 = vunpack.c.l.b16 %v221
    %v766 = vunpack.c.h.b16 %v221
    %v767 = vunpack.c.l.b16 %v222
    %v768 = vunpack.c.h.b16 %v222
    %v769 = vunpack.c.l.b16 %v223
    %v770 = vunpack.c.h.b16 %v223
    %v771 = vunpack.c.l.b16 %v224
    %v772 = vunpack.c.h.b16 %v224
    %v773 = vunpack.c.l.b16 %v225
    %v774 = vunpack.c.h.b16 %v225
    %v775 = vunpack.c.l.b16 %v226
    %v776 = vunpack.c.h.b16 %v226
    %v777 = vunpack.c.l.b16 %v227
    %v778 = vunpack.c.h.b16 %v227
    %v779 = vunpack.c.l.b16 %v228
    %v780 = vunpack.c.h.b16 %v228
    %v781 = vunpack.c.l.b16 %v229
    %v782 = vunpack.c.h.b16 %v229
    %v783 = vunpack.c.l.b16 %v230
    %v784 = vunpack.c.h.b16 %v230
    %v785 = vunpack.c.l.b16 %v231
    %v786 = vunpack.c.h.b16 %v231
    %v787 = vunpack.c.l.b16 %v232
    %v788 = vunpack.c.h.b16 %v232
    %v789 = vunpack.c.l.b16 %v233
    %v790 = vunpack.c.h.b16 %v233
    %v791 = vunpack.c.l.b16 %v234
    %v792 = vunpack.c.h.b16 %v234
    %v793 = vunpack.c.l.b16 %v235
    %v794 = vunpack.c.h.b16 %v235
    %v795 = vunpack.c.l.b16 %v236
    %v796 = vunpack.c.h.b16 %v236
    %v797 = vunpack.c.l.b16 %v237
    %v798 = vunpack.c.h.b16 %v237
    %v799 = vunpack.c.l.b16 %v238
    %v800 = vunpack.c.h.b16 %v238
    %v801 = vunpack.c.l.b16 %v239
    %v802 = vunpack.c.h.b16 %v239
    %v803 = vunpack.c.l.b16 %v240
    %v804 = vunpack.c.h.b16 %v240
    %v805 = vunpack.c.l.b16 %v241
    %v806 = vunpack.c.h.b16 %v241
    %v807 = vunpack.c.l.b16 %v242
    %v808 = vunpack.c.h.b16 %v242
    %v809 = vunpack.c.l.b16 %v243
    %v810 = vunpack.c.h.b16 %v243
    %v811 = vunpack.c.l.b16 %v244
    %v812 = vunpack.c.h.b16 %v244
    %v813 = vunpack.c.l.b16 %v245
    %v814 = vunpack.c.h.b16 %v245
    %v815 = vunpack.c.l.b16 %v246
    %v816 = vunpack.c.h.b16 %v246
    %v817 = vunpack.c.l.b16 %v247
    %v818 = vunpack.c.h.b16 %v247
    %v819 = vunpack.c.l.b16 %v248
    %v820 = vunpack.c.h.b16 %v248
    %v821 = vunpack.c.l.b16 %v249
    %v822 = vunpack.c.h.b16 %v249
    %v823 = vunpack.c.l.b16 %v250
    %v824 = vunpack.c.h.b16 %v250
    %v825 = vunpack.c.l.b16 %v251
    %v826 = vunpack.c.h.b16 %v251
    %v827 = vunpack.c.l.b16 %v252
    %v828 = vunpack.c.h.b16 %v252
    %v829 = vunpack.c.l.b16 %v253
    %v830 = vunpack.c.h.b16 %v253
    %v831 = vunpack.c.l.b16 %v254
    %v832 = vunpack.c.h.b16 %v254
    %v833 = vunpack.c.l.b16 %v255
    %v834 = vunpack.c.h.b16 %v255
    %v835 = vunpack.c.l.b16 %v256
    %v836 = vunpack.c.h.b16 %v256
    %v837 = vunpack.c.l.b16 %v257
    %v838 = vunpack.c.h.b16 %v257
    %v839 = vunpack.c.l.b16 %v258
    %v840 = vunpack.c.h.b16 %v258
    %v841 = vunpack.c.l.b16 %v259
    %v842 = vunpack.c.h.b16 %v259
    %v843 = vunpack.c.l.b16 %v260
    %v844 = vunpack.c.h.b16 %v260
    %v845 = vunpack.c.l.b16 %v261
    %v846 = vunpack.c.h.b16 %v261
    %v847 = vunpack.c.l.b16 %v262
    %v848 = vunpack.c.h.b16 %v262
    %v849 = vunpack.c.l.b16 %v263
    %v850 = vunpack.c.h.b16 %v263
    %v851 = vunpack.c.l.b16 %v264
    %v852 = vunpack.c.h.b16 %v264
    %v853 = vunpack.c.l.b16 %v265
    %v854 = vunpack.c.h.b16 %v265
    %v855 = vunpack.c.l.b16 %v266
    %v856 = vunpack.c.h.b16 %v266
    %v857 = vunpack.c.l.b16 %v267
    %v858 = vunpack.c.h.b16 %v267
    %v859 = vunpack.c.l.b16 %v268
    %v860 = vunpack.c.h.b16 %v268
    %v861 = vunpack.c.l.b16 %v269
    %v862 = vunpack.c.h.b16 %v269
    %v863 = vunpack.c.l.b16 %v270
    %v864 = vunpack.c.h.b16 %v270
    %v865 = vunpack.c.l.b16 %v271
    %v866 = vunpack.c.h.b16 %v271
    %v867 = vunpack.c.l.b16 %v272
    %v868 = vunpack.c.h.b16 %v272
    %v869 = vunpack.c.l.b16 %v273
    %v870 = vunpack.c.h.b16 %v273
    %v871 = vunpack.c.l.b16 %v274
    %v872 = vunpack.c.h.b16 %v274
    %v873 = vunpack.c.l.b16 %v275
    %v874 = vunpack.c.h.b16 %v275
    %v875 = vunpack.c.l.b16 %v276
    %v876 = vunpack.c.h.b16 %v276
    %v877 = vunpack.c.l.b16 %v277
    %v878 = vunpack.c.h.b16 %v277
    %v879 = vunpack.c.l.b16 %v278
    %v880 = vunpack.c.h.b16 %v278
    %v881 = vunpack.c.l.b16 %v279
    %v882 = vunpack.c.h.b16 %v279
    %v883 = vunpack.c.l.b16 %v280
    %v884 = vunpack.c.h.b16 %v280
    %v885 = vunpack.c.l.b16 %v281
    %v886 = vunpack.c.h.b16 %v281
    %v887 = vunpack.c.l.b16 %v282
    %v888 = vunpack.c.h.b16 %v282
    %v889 = vpack.c.b16 %v509, %v505
    %v890 = vpack.c.b16 %v510, %v506
    %v891 = vpack.c.b16 %v511, %v507
    %v892 = vpack.c.b16 %v512, %v508
    %v893 = vpack.c.b16 %v517, %v513
    %v894 = vpack.c.b16 %v518, %v514
    %v895 = vpack.c.b16 %v519, %v515
    %v896 = vpack.c.b16 %v520, %v516
    %v897 = vpack.c.b16 %v525, %v521
    %v898 = vpack.c.b16 %v526, %v522
    %v899 = vpack.c.b16 %v527, %v523
    %v900 = vpack.c.b16 %v528, %v524
    %v901 = vpack.c.b16 %v533, %v529
    %v902 = vpack.c.b16 %v534, %v530
    %v903 = vpack.c.b16 %v535, %v531
    %v904 = vpack.c.b16 %v536, %v532
    %v905 = vpack.c.b16 %v541, %v537
    %v906 = vpack.c.b16 %v542, %v538
    %v907 = vpack.c.b16 %v543, %v539
    %v908 = vpack.c.b16 %v544, %v540
    %v909 = vpack.c.b16 %v549, %v545
    %v910 = vpack.c.b16 %v550, %v546
    %v911 = vpack.c.b16 %v551, %v547
    %v912 = vpack.c.b16 %v552, %v548
    %v913 = vpack.c.b16 %v557, %v553
    %v914 = vpack.c.b16 %v558, %v554
    %v915 = vpack.c.b16 %v559, %v555
    %v916 = vpack.c.b16 %v560, %v556
    %v917 = vpack.c.b16 %v565, %v561
    %v918 = vpack.c.b16 %v566, %v562
    %v919 = vpack.c.b16 %v567, %v563
    %v920 = vpack.c.b16 %v568, %v564
    %v921 = vpack.c.b16 %v573, %v569
    %v922 = vpack.c.b16 %v574, %v570
    %v923 = vpack.c.b16 %v575, %v571
    %v924 = vpack.c.b16 %v576, %v572
    %v925 = vpack.c.b16 %v581, %v577
    %v926 = vpack.c.b16 %v582, %v578
    %v927 = vpack.c.b16 %v583, %v579
    %v928 = vpack.c.b16 %v584, %v580
    %v929 = vpack.c.b16 %v589, %v585
    %v930 = vpack.c.b16 %v590, %v586
    %v931 = vpack.c.b16 %v591, %v587
    %v932 = vpack.c.b16 %v592, %v588
    %v933 = vpack.c.b16 %v597, %v593
    %v934 = vpack.c.b16 %v598, %v594
    %v935 = vpack.c.b16 %v599, %v595
    %v936 = vpack.c.b16 %v600, %v596
    %v937 = vpack.c.b16 %v605, %v601
    %v938 = vpack.c.b16 %v606, %v602
    %v939 = vpack.c.b16 %v607, %v603
    %v940 = vpack.c.b16 %v608, %v604
    %v941 = vpack.c.b16 %v613, %v609
    %v942 = vpack.c.b16 %v614, %v610
    %v943 = vpack.c.b16 %v615, %v611
    %v944 = vpack.c.b16 %v616, %v612
    %v945 = vpack.c.b16 %v621, %v617
    %v946 = vpack.c.b16 %v622, %v618
    %v947 = vpack.c.b16 %v623, %v619
    %v948 = vpack.c.b16 %v624, %v620
    %v949 = vpack.c.b16 %v629, %v625
    %v950 = vpack.c.b16 %v630, %v626
    %v951 = vpack.c.b16 %v631, %v627
    %v952 = vpack.c.b16 %v632, %v628
    %v953 = vpack.c.b16 %v637, %v633
    %v954 = vpack.c.b16 %v638, %v634
    %v955 = vpack.c.b16 %v639, %v635
    %v956 = vpack.c.b16 %v640, %v636
    %v957 = vpack.c.b16 %v645, %v641
    %v958 = vpack.c.b16 %v646, %v642
    %v959 = vpack.c.b16 %v647, %v643
    %v960 = vpack.c.b16 %v648, %v644
    %v961 = vpack.c.b16 %v653, %v649
    %v962 = vpack.c.b16 %v654, %v650
    %v963 = vpack.c.b16 %v655, %v651
    %v964 = vpack.c.b16 %v656, %v652
    %v965 = vpack.c.b16 %v661, %v657
    %v966 = vpack.c.b16 %v662, %v658
    %v967 = vpack.c.b16 %v663, %v659
    %v968 = vpack.c.b16 %v664, %v660
    %v969 = vpack.c.b16 %v669, %v665
    %v970 = vpack.c.b16 %v670, %v666
    %v971 = vpack.c.b16 %v671, %v667
    %v972 = vpack.c.b16 %v672, %v668
    %v973 = vpack.c.b16 %v677, %v673
    %v974 = vpack.c.b16 %v678, %v674
    %v975 = vpack.c.b16 %v679, %v675
    %v976 = vpack.c.b16 %v680, %v676
    %v977 = vpack.c.b16 %v685, %v681
    %v978 = vpack.c.b16 %v686, %v682
    %v979 = vpack.c.b16 %v687, %v683
    %v980 = vpack.c.b16 %v688, %v684
    %v981 = vpack.c.b16 %v693, %v689
    %v982 = vpack.c.b16 %v694, %v690
    %v983 = vpack.c.b16 %v695, %v691
    %v984 = vpack.c.b16 %v696, %v692
    %v985 = vpack.c.b16 %v701, %v697
    %v986 = vpack.c.b16 %v702, %v698
    %v987 = vpack.c.b16 %v703, %v699
    %v988 = vpack.c.b16 %v704, %v700
    %v989 = vpack.c.b16 %v709, %v705
    %v990 = vpack.c.b16 %v710, %v706
    %v991 = vpack.c.b16 %v711, %v707
    %v992 = vpack.c.b16 %v712, %v708
    %v993 = vpack.c.b16 %v717, %v713
    %v994 = vpack.c.b16 %v718, %v714
    %v995 = vpack.c.b16 %v719, %v715
    %v996 = vpack.c.b16 %v720, %v716
    %v997 = vpack.c.b16 %v725, %v721
    %v998 = vpack.c.b16 %v726, %v722
    %v999 = vpack.c.b16 %v727, %v723
    %v1000 = vpack.c.b16 %v728, %v724
    %v1001 = vpack.c.b16 %v733, %v729
    %v1002 = vpack.c.b16 %v734, %v730
    %v1003 = vpack.c.b16 %v735, %v731
    %v1004 = vpack.c.b16 %v736, %v732
    %v1005 = vpack.c.b16 %v741, %v737
    %v1006 = vpack.c.b16 %v742, %v738
    %v1007 = vpack.c.b16 %v743, %v739
    %v1008 = vpack.c.b16 %v744, %v740
    %v1009 = vpack.c.b16 %v749, %v745
    %v1010 = vpack.c.b16 %v750, %v746
    %v1011 = vpack.c.b16 %v751, %v747
    %v1012 = vpack.c.b16 %v752, %v748
    %v1013 = vpack.c.b16 %v757, %v753
    %v1014 = vpack.c.b16 %v758, %v754
    %v1015 = vpack.c.b16 %v759, %v755
    %v1016 = vpack.c.b16 %v760, %v756
    %v1017 = vpack.c.b16 %v765, %v761
    %v1018 = vpack.c.b16 %v766, %v762
    %v1019 = vpack.c.b16 %v767, %v763
    %v1020 = vpack.c.b16 %v768, %v764
    %v1021 = vpack.c.b16 %v773, %v769
    %v1022 = vpack.c.b16 %v774, %v770
    %v1023 = vpack.c.b16 %v775, %v771
    %v1024 = vpack.c.b16 %v776, %v772
    %v1025 = vpack.c.b16 %v781, %v777
    %v1026 = vpack.c.b16 %v782, %v778
    %v1027 = vpack.c.b16 %v783, %v779
    %v1028 = vpack.c.b16 %v784, %v780
    %v1029 = vpack.c.b16 %v789, %v785
    %v1030 = vpack.c.b16 %v790, %v786
    %v1031 = vpack.c.b16 %v791, %v787
    %v1032 = vpack.c.b16 %v792, %v788
    %v1033 = vpack.c.b16 %v797, %v793
    %v1034 = vpack.c.b16 %v798, %v794
    %v1035 = vpack.c.b16 %v799, %v795
    %v1036 = vpack.c.b16 %v800, %v796
    %v1037 = vpack.c.b16 %v805, %v801
    %v1038 = vpack.c.b16 %v806, %v802
    %v1039 = vpack.c.b16 %v807, %v803
    %v1040 = vpack.c.b16 %v808, %v804
    %v1041 = vpack.c.b16 %v813, %v809
    %v1042 = vpack.c.b16 %v814, %v810
    %v1043 = vpack.c.b16 %v815, %v811
    %v1044 = vpack.c.b16 %v816, %v812
    %v1045 = vpack.c.b16 %v821, %v817
    %v1046 = vpack.c.b16 %v822, %v818
    %v1047 = vpack.c.b16 %v823, %v819
    %v1048 = vpack.c.b16 %v824, %v820
    %v1049 = vpack.c.b16 %v829, %v825
    %v1050 = vpack.c.b16 %v830, %v826
    %v1051 = vpack.c.b16 %v831, %v827
    %v1052 = vpack.c.b16 %v832, %v828
    %v1053 = vpack.c.b16 %v837, %v833
    %v1054 = vpack.c.b16 %v838, %v834
    %v1055 = vpack.c.b16 %v839, %v835
    %v1056 = vpack.c.b16 %v840, %v836
    %v1057 = vpack.c.b16 %v845, %v841
    %v1058 = vpack.c.b16 %v846, %v842
    %v1059 = vpack.c.b16 %v847, %v843
    %v1060 = vpack.c.b16 %v848, %v844
    %v1061 = vpack.c.b16 %v853, %v849
    %v1062 = vpack.c.b16 %v854, %v850
    %v1063 = vpack.c.b16 %v855, %v851
    %v1064 = vpack.c.b16 %v856, %v852
    %v1065 = vpack.c.b16 %v861, %v857
    %v1066 = vpack.c.b16 %v862, %v858
    %v1067 = vpack.c.b16 %v863, %v859
    %v1068 = vpack.c.b16 %v864, %v860
    %v1069 = vpack.c.b16 %v869, %v865
    %v1070 = vpack.c.b16 %v870, %v866
    %v1071 = vpack.c.b16 %v871, %v867
    %v1072 = vpack.c.b16 %v872, %v868
    %v1073 = vpack.c.b16 %v877, %v873
    %v1074 = vpack.c.b16 %v878, %v874
    %v1075 = vpack.c.b16 %v879, %v875
    %v1076 = vpack.c.b16 %v880, %v876
    %v1077 = vpack.c.b16 %v885, %v881
    %v1078 = vpack.c.b16 %v886, %v882
    %v1079 = vpack.c.b16 %v887, %v883
    %v1080 = vpack.c.b16 %v888, %v884
    %1273 = vmatpush.bf16.msra.mxu0 %v917
    %1274 = vmatpush.bf16.msra.mxu0 %v913
    %1275 = vmatpush.bf16.msra.mxu0 %v909
    %1276 = vmatpush.bf16.msra.mxu0 %v905
    %1277 = vmatpush.bf16.msra.mxu0 %v901
    %1278 = vmatpush.bf16.msra.mxu0 %v897
    %1279 = vmatpush.bf16.msra.mxu0 %v893
    %1280 = vmatpush.bf16.msra.mxu0 %v889
    %1281 = vmatmul.bf16.gmra.mxu0 %v301
    %v1282 = vpop.f32.mrf.mxu0
    %v1283 = vadd.f32 0.0, %v1282
    %v1284 = vpop.f32.mrf.mxu0
    %v1285 = vadd.f32 0.0, %v1284
    %1286 = vdwg.mxu0
    %1287 = vmatpush.bf16.msra.mxu0 %v949
    %1288 = vmatpush.bf16.msra.mxu0 %v945
    %1289 = vmatpush.bf16.msra.mxu0 %v941
    %1290 = vmatpush.bf16.msra.mxu0 %v937
    %1291 = vmatpush.bf16.msra.mxu0 %v933
    %1292 = vmatpush.bf16.msra.mxu0 %v929
    %1293 = vmatpush.bf16.msra.mxu0 %v925
    %1294 = vmatpush.bf16.msra.mxu0 %v921
    %1295 = vmatmul.bf16.gmra.mxu0 %v302
    %v1296 = vpop.f32.mrf.mxu0
    %v1297 = vadd.f32 %v1283, %v1296
    %v1298 = vpop.f32.mrf.mxu0
    %v1299 = vadd.f32 %v1285, %v1298
    %1300 = vdwg.mxu0
    %1301 = vmatpush.bf16.msra.mxu0 %v981
    %1302 = vmatpush.bf16.msra.mxu0 %v977
    %1303 = vmatpush.bf16.msra.mxu0 %v973
    %1304 = vmatpush.bf16.msra.mxu0 %v969
    %1305 = vmatpush.bf16.msra.mxu0 %v965
    %1306 = vmatpush.bf16.msra.mxu0 %v961
    %1307 = vmatpush.bf16.msra.mxu0 %v957
    %1308 = vmatpush.bf16.msra.mxu0 %v953
    %1309 = vmatmul.bf16.gmra.mxu0 %v303
    %v1310 = vpop.f32.mrf.mxu0
    %v1311 = vadd.f32 %v1297, %v1310
    %v1312 = vpop.f32.mrf.mxu0
    %v1313 = vadd.f32 %v1299, %v1312
    %1314 = vdwg.mxu0
    %1315 = vmatpush.bf16.msra.mxu0 %v1013
    %1316 = vmatpush.bf16.msra.mxu0 %v1009
    %1317 = vmatpush.bf16.msra.mxu0 %v1005
    %1318 = vmatpush.bf16.msra.mxu0 %v1001
    %1319 = vmatpush.bf16.msra.mxu0 %v997
    %1320 = vmatpush.bf16.msra.mxu0 %v993
    %1321 = vmatpush.bf16.msra.mxu0 %v989
    %1322 = vmatpush.bf16.msra.mxu0 %v985
    %1323 = vmatmul.bf16.gmra.mxu0 %v304
    %v1324 = vpop.f32.mrf.mxu0
    %v1325 = vadd.f32 %v1311, %v1324
    %v1326 = vpop.f32.mrf.mxu0
    %v1327 = vadd.f32 %v1313, %v1326
    %1328 = vdwg.mxu0
    %1329 = vmatpush.bf16.msra.mxu0 %v1045
    %1330 = vmatpush.bf16.msra.mxu0 %v1041
    %1331 = vmatpush.bf16.msra.mxu0 %v1037
    %1332 = vmatpush.bf16.msra.mxu0 %v1033
    %1333 = vmatpush.bf16.msra.mxu0 %v1029
    %1334 = vmatpush.bf16.msra.mxu0 %v1025
    %1335 = vmatpush.bf16.msra.mxu0 %v1021
    %1336 = vmatpush.bf16.msra.mxu0 %v1017
    %1337 = vmatmul.bf16.gmra.mxu0 %v305
    %v1338 = vpop.f32.mrf.mxu0
    %v1339 = vadd.f32 %v1325, %v1338
    %v1340 = vpop.f32.mrf.mxu0
    %v1341 = vadd.f32 %v1327, %v1340
    %1342 = vdwg.mxu0
    %1343 = vmatpush.bf16.msra.mxu0 %v1077
    %1344 = vmatpush.bf16.msra.mxu0 %v1073
    %1345 = vmatpush.bf16.msra.mxu0 %v1069
    %1346 = vmatpush.bf16.msra.mxu0 %v1065
    %1347 = vmatpush.bf16.msra.mxu0 %v1061
    %1348 = vmatpush.bf16.msra.mxu0 %v1057
    %1349 = vmatpush.bf16.msra.mxu0 %v1053
    %1350 = vmatpush.bf16.msra.mxu0 %v1049
    %1351 = vmatmul.bf16.gmra.mxu0 %v306
    %v1352 = vpop.f32.mrf.mxu0
    %v1353 = vadd.f32 %v1339, %v1352
    %v1354 = vpop.f32.mrf.mxu0
    %v1355 = vadd.f32 %v1341, %v1354
    %1356 = vdwg.mxu0
    %1357 = vmatpush.bf16.msra.mxu0 %v918
    %1358 = vmatpush.bf16.msra.mxu0 %v914
    %1359 = vmatpush.bf16.msra.mxu0 %v910
    %1360 = vmatpush.bf16.msra.mxu0 %v906
    %1361 = vmatpush.bf16.msra.mxu0 %v902
    %1362 = vmatpush.bf16.msra.mxu0 %v898
    %1363 = vmatpush.bf16.msra.mxu0 %v894
    %1364 = vmatpush.bf16.msra.mxu0 %v890
    %1365 = vmatmul.bf16.gmra.mxu0 %v301
    %v1366 = vpop.f32.mrf.mxu0
    %v1367 = vadd.f32 0.0, %v1366
    %v1368 = vpop.f32.mrf.mxu0
    %v1369 = vadd.f32 0.0, %v1368
    %1370 = vdwg.mxu0
    %1371 = vmatpush.bf16.msra.mxu0 %v950
    %1372 = vmatpush.bf16.msra.mxu0 %v946
    %1373 = vmatpush.bf16.msra.mxu0 %v942
    %1374 = vmatpush.bf16.msra.mxu0 %v938
    %1375 = vmatpush.bf16.msra.mxu0 %v934
    %1376 = vmatpush.bf16.msra.mxu0 %v930
    %1377 = vmatpush.bf16.msra.mxu0 %v926
    %1378 = vmatpush.bf16.msra.mxu0 %v922
    %1379 = vmatmul.bf16.gmra.mxu0 %v302
    %v1380 = vpop.f32.mrf.mxu0
    %v1381 = vadd.f32 %v1367, %v1380
    %v1382 = vpop.f32.mrf.mxu0
    %v1383 = vadd.f32 %v1369, %v1382
    %1384 = vdwg.mxu0
    %1385 = vmatpush.bf16.msra.mxu0 %v982
    %1386 = vmatpush.bf16.msra.mxu0 %v978
    %1387 = vmatpush.bf16.msra.mxu0 %v974
    %1388 = vmatpush.bf16.msra.mxu0 %v970
    %1389 = vmatpush.bf16.msra.mxu0 %v966
    %1390 = vmatpush.bf16.msra.mxu0 %v962
    %1391 = vmatpush.bf16.msra.mxu0 %v958
    %1392 = vmatpush.bf16.msra.mxu0 %v954
    %1393 = vmatmul.bf16.gmra.mxu0 %v303
    %v1394 = vpop.f32.mrf.mxu0
    %v1395 = vadd.f32 %v1381, %v1394
    %v1396 = vpop.f32.mrf.mxu0
    %v1397 = vadd.f32 %v1383, %v1396
    %1398 = vdwg.mxu0
    %1399 = vmatpush.bf16.msra.mxu0 %v1014
    %1400 = vmatpush.bf16.msra.mxu0 %v1010
    %1401 = vmatpush.bf16.msra.mxu0 %v1006
    %1402 = vmatpush.bf16.msra.mxu0 %v1002
    %1403 = vmatpush.bf16.msra.mxu0 %v998
    %1404 = vmatpush.bf16.msra.mxu0 %v994
    %1405 = vmatpush.bf16.msra.mxu0 %v990
    %1406 = vmatpush.bf16.msra.mxu0 %v986
    %1407 = vmatmul.bf16.gmra.mxu0 %v304
    %v1408 = vpop.f32.mrf.mxu0
    %v1409 = vadd.f32 %v1395, %v1408
    %v1410 = vpop.f32.mrf.mxu0
    %v1411 = vadd.f32 %v1397, %v1410
    %1412 = vdwg.mxu0
    %1413 = vmatpush.bf16.msra.mxu0 %v1046
    %1414 = vmatpush.bf16.msra.mxu0 %v1042
    %1415 = vmatpush.bf16.msra.mxu0 %v1038
    %1416 = vmatpush.bf16.msra.mxu0 %v1034
    %1417 = vmatpush.bf16.msra.mxu0 %v1030
    %1418 = vmatpush.bf16.msra.mxu0 %v1026
    %1419 = vmatpush.bf16.msra.mxu0 %v1022
    %1420 = vmatpush.bf16.msra.mxu0 %v1018
    %1421 = vmatmul.bf16.gmra.mxu0 %v305
    %v1422 = vpop.f32.mrf.mxu0
    %v1423 = vadd.f32 %v1409, %v1422
    %v1424 = vpop.f32.mrf.mxu0
    %v1425 = vadd.f32 %v1411, %v1424
    %1426 = vdwg.mxu0
    %1427 = vmatpush.bf16.msra.mxu0 %v1078
    %1428 = vmatpush.bf16.msra.mxu0 %v1074
    %1429 = vmatpush.bf16.msra.mxu0 %v1070
    %1430 = vmatpush.bf16.msra.mxu0 %v1066
    %1431 = vmatpush.bf16.msra.mxu0 %v1062
    %1432 = vmatpush.bf16.msra.mxu0 %v1058
    %1433 = vmatpush.bf16.msra.mxu0 %v1054
    %1434 = vmatpush.bf16.msra.mxu0 %v1050
    %1435 = vmatmul.bf16.gmra.mxu0 %v306
    %v1436 = vpop.f32.mrf.mxu0
    %v1437 = vadd.f32 %v1423, %v1436
    %v1438 = vpop.f32.mrf.mxu0
    %v1439 = vadd.f32 %v1425, %v1438
    %1440 = vdwg.mxu0
    %1441 = vmatpush.bf16.msra.mxu0 %v919
    %1442 = vmatpush.bf16.msra.mxu0 %v915
    %1443 = vmatpush.bf16.msra.mxu0 %v911
    %1444 = vmatpush.bf16.msra.mxu0 %v907
    %1445 = vmatpush.bf16.msra.mxu0 %v903
    %1446 = vmatpush.bf16.msra.mxu0 %v899
    %1447 = vmatpush.bf16.msra.mxu0 %v895
    %1448 = vmatpush.bf16.msra.mxu0 %v891
    %1449 = vmatmul.bf16.gmra.mxu0 %v301
    %v1450 = vpop.f32.mrf.mxu0
    %v1451 = vadd.f32 0.0, %v1450
    %v1452 = vpop.f32.mrf.mxu0
    %v1453 = vadd.f32 0.0, %v1452
    %1454 = vdwg.mxu0
    %1455 = vmatpush.bf16.msra.mxu0 %v951
    %1456 = vmatpush.bf16.msra.mxu0 %v947
    %1457 = vmatpush.bf16.msra.mxu0 %v943
    %1458 = vmatpush.bf16.msra.mxu0 %v939
    %1459 = vmatpush.bf16.msra.mxu0 %v935
    %1460 = vmatpush.bf16.msra.mxu0 %v931
    %1461 = vmatpush.bf16.msra.mxu0 %v927
    %1462 = vmatpush.bf16.msra.mxu0 %v923
    %1463 = vmatmul.bf16.gmra.mxu0 %v302
    %v1464 = vpop.f32.mrf.mxu0
    %v1465 = vadd.f32 %v1451, %v1464
    %v1466 = vpop.f32.mrf.mxu0
    %v1467 = vadd.f32 %v1453, %v1466
    %1468 = vdwg.mxu0
    %1469 = vmatpush.bf16.msra.mxu0 %v983
    %1470 = vmatpush.bf16.msra.mxu0 %v979
    %1471 = vmatpush.bf16.msra.mxu0 %v975
    %1472 = vmatpush.bf16.msra.mxu0 %v971
    %1473 = vmatpush.bf16.msra.mxu0 %v967
    %1474 = vmatpush.bf16.msra.mxu0 %v963
    %1475 = vmatpush.bf16.msra.mxu0 %v959
    %1476 = vmatpush.bf16.msra.mxu0 %v955
    %1477 = vmatmul.bf16.gmra.mxu0 %v303
    %v1478 = vpop.f32.mrf.mxu0
    %v1479 = vadd.f32 %v1465, %v1478
    %v1480 = vpop.f32.mrf.mxu0
    %v1481 = vadd.f32 %v1467, %v1480
    %1482 = vdwg.mxu0
    %1483 = vmatpush.bf16.msra.mxu0 %v1015
    %1484 = vmatpush.bf16.msra.mxu0 %v1011
    %1485 = vmatpush.bf16.msra.mxu0 %v1007
    %1486 = vmatpush.bf16.msra.mxu0 %v1003
    %1487 = vmatpush.bf16.msra.mxu0 %v999
    %1488 = vmatpush.bf16.msra.mxu0 %v995
    %1489 = vmatpush.bf16.msra.mxu0 %v991
    %1490 = vmatpush.bf16.msra.mxu0 %v987
    %1491 = vmatmul.bf16.gmra.mxu0 %v304
    %v1492 = vpop.f32.mrf.mxu0
    %v1493 = vadd.f32 %v1479, %v1492
    %v1494 = vpop.f32.mrf.mxu0
    %v1495 = vadd.f32 %v1481, %v1494
    %1496 = vdwg.mxu0
    %1497 = vmatpush.bf16.msra.mxu0 %v1047
    %1498 = vmatpush.bf16.msra.mxu0 %v1043
    %1499 = vmatpush.bf16.msra.mxu0 %v1039
    %1500 = vmatpush.bf16.msra.mxu0 %v1035
    %1501 = vmatpush.bf16.msra.mxu0 %v1031
    %1502 = vmatpush.bf16.msra.mxu0 %v1027
    %1503 = vmatpush.bf16.msra.mxu0 %v1023
    %1504 = vmatpush.bf16.msra.mxu0 %v1019
    %1505 = vmatmul.bf16.gmra.mxu0 %v305
    %v1506 = vpop.f32.mrf.mxu0
    %v1507 = vadd.f32 %v1493, %v1506
    %v1508 = vpop.f32.mrf.mxu0
    %v1509 = vadd.f32 %v1495, %v1508
    %1510 = vdwg.mxu0
    %1511 = vmatpush.bf16.msra.mxu0 %v1079
    %1512 = vmatpush.bf16.msra.mxu0 %v1075
    %1513 = vmatpush.bf16.msra.mxu0 %v1071
    %1514 = vmatpush.bf16.msra.mxu0 %v1067
    %1515 = vmatpush.bf16.msra.mxu0 %v1063
    %1516 = vmatpush.bf16.msra.mxu0 %v1059
    %1517 = vmatpush.bf16.msra.mxu0 %v1055
    %1518 = vmatpush.bf16.msra.mxu0 %v1051
    %1519 = vmatmul.bf16.gmra.mxu0 %v306
    %v1520 = vpop.f32.mrf.mxu0
    %v1521 = vadd.f32 %v1507, %v1520
    %v1522 = vpop.f32.mrf.mxu0
    %v1523 = vadd.f32 %v1509, %v1522
    %1524 = vdwg.mxu0
    %1525 = vmatpush.bf16.msra.mxu0 %v920
    %1526 = vmatpush.bf16.msra.mxu0 %v916
    %1527 = vmatpush.bf16.msra.mxu0 %v912
    %1528 = vmatpush.bf16.msra.mxu0 %v908
    %1529 = vmatpush.bf16.msra.mxu0 %v904
    %1530 = vmatpush.bf16.msra.mxu0 %v900
    %1531 = vmatpush.bf16.msra.mxu0 %v896
    %1532 = vmatpush.bf16.msra.mxu0 %v892
    %1533 = vmatmul.bf16.gmra.mxu0 %v301
    %v1534 = vpop.f32.mrf.mxu0
    %v1535 = vadd.f32 0.0, %v1534
    %v1536 = vpop.f32.mrf.mxu0
    %v1537 = vadd.f32 0.0, %v1536
    %1538 = vdwg.mxu0
    %1539 = vmatpush.bf16.msra.mxu0 %v952
    %1540 = vmatpush.bf16.msra.mxu0 %v948
    %1541 = vmatpush.bf16.msra.mxu0 %v944
    %1542 = vmatpush.bf16.msra.mxu0 %v940
    %1543 = vmatpush.bf16.msra.mxu0 %v936
    %1544 = vmatpush.bf16.msra.mxu0 %v932
    %1545 = vmatpush.bf16.msra.mxu0 %v928
    %1546 = vmatpush.bf16.msra.mxu0 %v924
    %1547 = vmatmul.bf16.gmra.mxu0 %v302
    %v1548 = vpop.f32.mrf.mxu0
    %v1549 = vadd.f32 %v1535, %v1548
    %v1550 = vpop.f32.mrf.mxu0
    %v1551 = vadd.f32 %v1537, %v1550
    %1552 = vdwg.mxu0
    %1553 = vmatpush.bf16.msra.mxu0 %v984
    %1554 = vmatpush.bf16.msra.mxu0 %v980
    %1555 = vmatpush.bf16.msra.mxu0 %v976
    %1556 = vmatpush.bf16.msra.mxu0 %v972
    %1557 = vmatpush.bf16.msra.mxu0 %v968
    %1558 = vmatpush.bf16.msra.mxu0 %v964
    %1559 = vmatpush.bf16.msra.mxu0 %v960
    %1560 = vmatpush.bf16.msra.mxu0 %v956
    %1561 = vmatmul.bf16.gmra.mxu0 %v303
    %v1562 = vpop.f32.mrf.mxu0
    %v1563 = vadd.f32 %v1549, %v1562
    %v1564 = vpop.f32.mrf.mxu0
    %v1565 = vadd.f32 %v1551, %v1564
    %1566 = vdwg.mxu0
    %1567 = vmatpush.bf16.msra.mxu0 %v1016
    %1568 = vmatpush.bf16.msra.mxu0 %v1012
    %1569 = vmatpush.bf16.msra.mxu0 %v1008
    %1570 = vmatpush.bf16.msra.mxu0 %v1004
    %1571 = vmatpush.bf16.msra.mxu0 %v1000
    %1572 = vmatpush.bf16.msra.mxu0 %v996
    %1573 = vmatpush.bf16.msra.mxu0 %v992
    %1574 = vmatpush.bf16.msra.mxu0 %v988
    %1575 = vmatmul.bf16.gmra.mxu0 %v304
    %v1576 = vpop.f32.mrf.mxu0
    %v1577 = vadd.f32 %v1563, %v1576
    %v1578 = vpop.f32.mrf.mxu0
    %v1579 = vadd.f32 %v1565, %v1578
    %1580 = vdwg.mxu0
    %1581 = vmatpush.bf16.msra.mxu0 %v1048
    %1582 = vmatpush.bf16.msra.mxu0 %v1044
    %1583 = vmatpush.bf16.msra.mxu0 %v1040
    %1584 = vmatpush.bf16.msra.mxu0 %v1036
    %1585 = vmatpush.bf16.msra.mxu0 %v1032
    %1586 = vmatpush.bf16.msra.mxu0 %v1028
    %1587 = vmatpush.bf16.msra.mxu0 %v1024
    %1588 = vmatpush.bf16.msra.mxu0 %v1020
    %1589 = vmatmul.bf16.gmra.mxu0 %v305
    %v1590 = vpop.f32.mrf.mxu0
    %v1591 = vadd.f32 %v1577, %v1590
    %v1592 = vpop.f32.mrf.mxu0
    %v1593 = vadd.f32 %v1579, %v1592
    %1594 = vdwg.mxu0
    %1595 = vmatpush.bf16.msra.mxu0 %v1080
    %1596 = vmatpush.bf16.msra.mxu0 %v1076
    %1597 = vmatpush.bf16.msra.mxu0 %v1072
    %1598 = vmatpush.bf16.msra.mxu0 %v1068
    %1599 = vmatpush.bf16.msra.mxu0 %v1064
    %1600 = vmatpush.bf16.msra.mxu0 %v1060
    %1601 = vmatpush.bf16.msra.mxu0 %v1056
    %1602 = vmatpush.bf16.msra.mxu0 %v1052
    %1603 = vmatmul.bf16.gmra.mxu0 %v306
    %v1604 = vpop.f32.mrf.mxu0
    %v1605 = vadd.f32 %v1591, %v1604
    %v1606 = vpop.f32.mrf.mxu0
    %v1607 = vadd.f32 %v1593, %v1606
    %1608 = vdwg.mxu0
    %v1609 = vadd.f32 %v77, %v1353
    %v1610 = vadd.f32 %v78, %v1437
    %v1611 = vadd.f32 %v79, %v1521
    %v1612 = vadd.f32 %v80, %v1605
    %v1613 = vadd.f32 %v81, %v1355
    %v1614 = vadd.f32 %v82, %v1439
    %v1615 = vadd.f32 %v83, %v1523
    %v1616 = vadd.f32 %v84, %v1607
    %1617 = vst [vmem:[#allocation2] sm:$0xff] %v1609
    %1618 = vst [vmem:[#allocation2 + $0x8] sm:$0xff] %v1610
    %1619 = vst [vmem:[#allocation2 + $0x10] sm:$0xff] %v1611
    %1620 = vst [vmem:[#allocation2 + $0x18] sm:$0xff] %v1612
    %1621 = vst [vmem:[#allocation2 + $0x20] sm:$0xff] %v1613
    %1622 = vst [vmem:[#allocation2 + $0x28] sm:$0xff] %v1614
    %1623 = vst [vmem:[#allocation2 + $0x30] sm:$0xff] %v1615
    %1624 = vst [vmem:[#allocation2 + $0x38] sm:$0xff] %v1616
    // Predicated region
    $region34: #{tpu_custom_call.1} parent=1 // pred_check
      %p1625 = pneg %p65
    $region35: #{tpu_custom_call.1} parent=1 // pred_check_branch
      %1627 = sbr.rel (%p1625) target = $region37
    $region36: #{tpu_custom_call.1} parent=1 // pred_region
      %v1628 = vld [vmem:[#allocation2] sm:$0xff]
      %v1629 = vld [vmem:[#allocation2 + $0x8] sm:$0xff]
      %v1630 = vld [vmem:[#allocation2 + $0x10] sm:$0xff]
      %v1631 = vld [vmem:[#allocation2 + $0x18] sm:$0xff]
      %v1632 = vld [vmem:[#allocation2 + $0x20] sm:$0xff]
      %v1633 = vld [vmem:[#allocation2 + $0x28] sm:$0xff]
      %v1634 = vld [vmem:[#allocation2 + $0x30] sm:$0xff]
      %v1635 = vld [vmem:[#allocation2 + $0x38] sm:$0xff]
      %v1636 = vmul.f32 %v1628, %v1628
      %v1637 = vmul.f32 %v1629, %v1629
      %v1638 = vmul.f32 %v1630, %v1630
      %v1639 = vmul.f32 %v1631, %v1631
      %v1640 = vmul.f32 %v1632, %v1632
      %v1641 = vmul.f32 %v1633, %v1633
      %v1642 = vmul.f32 %v1634, %v1634
      %v1643 = vmul.f32 %v1635, %v1635
      %v1644 = vadd.f32 %v1636, %v1637
      %v1645 = vadd.f32 %v1644, %v1638
      %v1646 = vadd.f32 %v1645, %v1639
      %1647 = vadd.xlane.f32.xlu0 %v1646
      %v1648 = vpop.xlane.xlu0 %1647
      %v1649 = vadd.f32 %v1640, %v1641
      %v1650 = vadd.f32 %v1649, %v1642
      %v1651 = vadd.f32 %v1650, %v1643
      %1652 = vadd.xlane.f32.xlu0 %v1651
      %v1653 = vpop.xlane.xlu0 %1652
      %v1654 = vadd.f32 %v1648, 1e-24
      %v1655 = vadd.f32 %v1653, 1e-24
      %v1656 = vrsqrt.pop %v1654
      %v1657 = vmul.f32 %v1656, %v1654
      %v1658 = vmul.f32 %v1657, %v1656
      %v1659 = vmul.f32 0.5, %v1658
      %v1660 = vsub.f32 1.5, %v1659
      %v1661 = vmul.f32 %v1656, %v1660
      %vm1662 = vweird.f32 %v1654
      %vm1663 = vweird.f32 %v1656
      %vm1664 = vmor %vm1662, %vm1663
      %v1665 = vsel %vm1664, %v1656, %v1661
      %v1666 = vrsqrt.pop %v1655
      %v1667 = vmul.f32 %v1666, %v1655
      %v1668 = vmul.f32 %v1667, %v1666
      %v1669 = vmul.f32 0.5, %v1668
      %v1670 = vsub.f32 1.5, %v1669
      %v1671 = vmul.f32 %v1666, %v1670
      %vm1672 = vweird.f32 %v1655
      %vm1673 = vweird.f32 %v1666
      %vm1674 = vmor %vm1672, %vm1673
      %v1675 = vsel %vm1674, %v1666, %v1671
      %v1676 = vmul.f32 %v1628, %v1665
      %v1677 = vmul.f32 %v1629, %v1665
      %v1678 = vmul.f32 %v1630, %v1665
      %v1679 = vmul.f32 %v1631, %v1665
      %v1680 = vmul.f32 %v1632, %v1675
      %v1681 = vmul.f32 %v1633, %v1675
      %v1682 = vmul.f32 %v1634, %v1675
      %v1683 = vmul.f32 %v1635, %v1675
      %v1684 = vld [vmem:[#allocation8] sm:$0xff]
      %v1685 = vld [vmem:[#allocation8 + $0x8] sm:$0xff]
      %v1686 = vld [vmem:[#allocation8 + $0x10] sm:$0xff]
      %v1687 = vld [vmem:[#allocation8 + $0x18] sm:$0xff]
      %v1688 = vld [vmem:[#allocation8 + $0x20] sm:$0xff]
      %v1689 = vld [vmem:[#allocation8 + $0x28] sm:$0xff]
      %v1690 = vld [vmem:[#allocation8 + $0x30] sm:$0xff]
      %v1691 = vld [vmem:[#allocation8 + $0x38] sm:$0xff]
      %v1692 = vld [vmem:[#allocation8 + $0x40] sm:$0xff]
      %v1693 = vld [vmem:[#allocation8 + $0x48] sm:$0xff]
      %v1694 = vld [vmem:[#allocation8 + $0x50] sm:$0xff]
      %v1695 = vld [vmem:[#allocation8 + $0x58] sm:$0xff]
      %v1696 = vld [vmem:[#allocation8 + $0x60] sm:$0xff]
      %v1697 = vld [vmem:[#allocation8 + $0x68] sm:$0xff]
      %v1698 = vld [vmem:[#allocation8 + $0x70] sm:$0xff]
      %v1699 = vld [vmem:[#allocation8 + $0x78] sm:$0xff]
      %v1700 = vld [vmem:[#allocation8 + $0x80] sm:$0xff]
      %v1701 = vld [vmem:[#allocation8 + $0x88] sm:$0xff]
      %v1702 = vld [vmem:[#allocation8 + $0x90] sm:$0xff]
      %v1703 = vld [vmem:[#allocation8 + $0x98] sm:$0xff]
      %v1704 = vld [vmem:[#allocation8 + $0xa0] sm:$0xff]
      %v1705 = vld [vmem:[#allocation8 + $0xa8] sm:$0xff]
      %v1706 = vld [vmem:[#allocation8 + $0xb0] sm:$0xff]
      %v1707 = vld [vmem:[#allocation8 + $0xb8] sm:$0xff]
      %v1708 = vld [vmem:[#allocation8 + $0xc0] sm:$0xff]
      %v1709 = vld [vmem:[#allocation8 + $0xc8] sm:$0xff]
      %v1710 = vld [vmem:[#allocation8 + $0xd0] sm:$0xff]
      %v1711 = vld [vmem:[#allocation8 + $0xd8] sm:$0xff]
      %v1712 = vld [vmem:[#allocation8 + $0xe0] sm:$0xff]
      %v1713 = vld [vmem:[#allocation8 + $0xe8] sm:$0xff]
      %v1714 = vld [vmem:[#allocation8 + $0xf0] sm:$0xff]
      %v1715 = vld [vmem:[#allocation8 + $0xf8] sm:$0xff]
      %v1716 = vld [vmem:[#allocation8 + $0x100] sm:$0xff]
      %v1717 = vld [vmem:[#allocation8 + $0x108] sm:$0xff]
      %v1718 = vld [vmem:[#allocation8 + $0x110] sm:$0xff]
      %v1719 = vld [vmem:[#allocation8 + $0x118] sm:$0xff]
      %v1720 = vld [vmem:[#allocation8 + $0x120] sm:$0xff]
      %v1721 = vld [vmem:[#allocation8 + $0x128] sm:$0xff]
      %v1722 = vld [vmem:[#allocation8 + $0x130] sm:$0xff]
      %v1723 = vld [vmem:[#allocation8 + $0x138] sm:$0xff]
      %v1724 = vld [vmem:[#allocation8 + $0x140] sm:$0xff]
      %v1725 = vld [vmem:[#allocation8 + $0x148] sm:$0xff]
      %v1726 = vld [vmem:[#allocation8 + $0x150] sm:$0xff]
      %v1727 = vld [vmem:[#allocation8 + $0x158] sm:$0xff]
      %v1728 = vld [vmem:[#allocation8 + $0x160] sm:$0xff]
      %v1729 = vld [vmem:[#allocation8 + $0x168] sm:$0xff]
      %v1730 = vld [vmem:[#allocation8 + $0x170] sm:$0xff]
      %v1731 = vld [vmem:[#allocation8 + $0x178] sm:$0xff]
      %v1732 = vld [vmem:[#allocation8 + $0x180] sm:$0xff]
      %v1733 = vld [vmem:[#allocation8 + $0x188] sm:$0xff]
      %v1734 = vld [vmem:[#allocation8 + $0x190] sm:$0xff]
      %v1735 = vld [vmem:[#allocation8 + $0x198] sm:$0xff]
      %v1736 = vld [vmem:[#allocation8 + $0x1a0] sm:$0xff]
      %v1737 = vld [vmem:[#allocation8 + $0x1a8] sm:$0xff]
      %v1738 = vld [vmem:[#allocation8 + $0x1b0] sm:$0xff]
      %v1739 = vld [vmem:[#allocation8 + $0x1b8] sm:$0xff]
      %v1740 = vld [vmem:[#allocation8 + $0x1c0] sm:$0xff]
      %v1741 = vld [vmem:[#allocation8 + $0x1c8] sm:$0xff]
      %v1742 = vld [vmem:[#allocation8 + $0x1d0] sm:$0xff]
      %v1743 = vld [vmem:[#allocation8 + $0x1d8] sm:$0xff]
      %v1744 = vld [vmem:[#allocation8 + $0x1e0] sm:$0xff]
      %v1745 = vld [vmem:[#allocation8 + $0x1e8] sm:$0xff]
      %v1746 = vld [vmem:[#allocation8 + $0x1f0] sm:$0xff]
      %v1747 = vld [vmem:[#allocation8 + $0x1f8] sm:$0xff]
      %1748 = vmatpush.msra.mxu0 %v1699
      %1749 = vmatpush.msra.mxu0 %v1698
      %1750 = vmatpush.msra.mxu0 %v1697
      %1751 = vmatpush.msra.mxu0 %v1696
      %1752 = vmatpush.msra.mxu0 %v1695
      %1753 = vmatpush.msra.mxu0 %v1694
      %1754 = vmatpush.msra.mxu0 %v1693
      %1755 = vmatpush.msra.mxu0 %v1692
      %1756 = vmatpush.msra.mxu0 %v1691
      %1757 = vmatpush.msra.mxu0 %v1690
      %1758 = vmatpush.msra.mxu0 %v1689
      %1759 = vmatpush.msra.mxu0 %v1688
      %1760 = vmatpush.msra.mxu0 %v1687
      %1761 = vmatpush.msra.mxu0 %v1686
      %1762 = vmatpush.msra.mxu0 %v1685
      %1763 = vmatpush.msra.mxu0 %v1684
      %1764 = vmatmul.f32.gmra.mxu0 %v1676
      %v1765 = vpop.f32.mrf.mxu0
      %v1766 = vadd.f32 0.0, %v1765
      %1767 = vmatmul.f32.gmra.mxu0 %v1680
      %v1768 = vpop.f32.mrf.mxu0
      %v1769 = vadd.f32 0.0, %v1768
      %1770 = vdwg.mxu0
      %1771 = vmatpush.msra.mxu0 %v1715
      %1772 = vmatpush.msra.mxu0 %v1714
      %1773 = vmatpush.msra.mxu0 %v1713
      %1774 = vmatpush.msra.mxu0 %v1712
      %1775 = vmatpush.msra.mxu0 %v1711
      %1776 = vmatpush.msra.mxu0 %v1710
      %1777 = vmatpush.msra.mxu0 %v1709
      %1778 = vmatpush.msra.mxu0 %v1708
      %1779 = vmatpush.msra.mxu0 %v1707
      %1780 = vmatpush.msra.mxu0 %v1706
      %1781 = vmatpush.msra.mxu0 %v1705
      %1782 = vmatpush.msra.mxu0 %v1704
      %1783 = vmatpush.msra.mxu0 %v1703
      %1784 = vmatpush.msra.mxu0 %v1702
      %1785 = vmatpush.msra.mxu0 %v1701
      %1786 = vmatpush.msra.mxu0 %v1700
      %1787 = vmatmul.f32.gmra.mxu0 %v1677
      %v1788 = vpop.f32.mrf.mxu0
      %v1789 = vadd.f32 %v1766, %v1788
      %1790 = vmatmul.f32.gmra.mxu0 %v1681
      %v1791 = vpop.f32.mrf.mxu0
      %v1792 = vadd.f32 %v1769, %v1791
      %1793 = vdwg.mxu0
      %1794 = vmatpush.msra.mxu0 %v1731
      %1795 = vmatpush.msra.mxu0 %v1730
      %1796 = vmatpush.msra.mxu0 %v1729
      %1797 = vmatpush.msra.mxu0 %v1728
      %1798 = vmatpush.msra.mxu0 %v1727
      %1799 = vmatpush.msra.mxu0 %v1726
      %1800 = vmatpush.msra.mxu0 %v1725
      %1801 = vmatpush.msra.mxu0 %v1724
      %1802 = vmatpush.msra.mxu0 %v1723
      %1803 = vmatpush.msra.mxu0 %v1722
      %1804 = vmatpush.msra.mxu0 %v1721
      %1805 = vmatpush.msra.mxu0 %v1720
      %1806 = vmatpush.msra.mxu0 %v1719
      %1807 = vmatpush.msra.mxu0 %v1718
      %1808 = vmatpush.msra.mxu0 %v1717
      %1809 = vmatpush.msra.mxu0 %v1716
      %1810 = vmatmul.f32.gmra.mxu0 %v1678
      %v1811 = vpop.f32.mrf.mxu0
      %v1812 = vadd.f32 %v1789, %v1811
      %1813 = vmatmul.f32.gmra.mxu0 %v1682
      %v1814 = vpop.f32.mrf.mxu0
      %v1815 = vadd.f32 %v1792, %v1814
      %1816 = vdwg.mxu0
      %1817 = vmatpush.msra.mxu0 %v1747
      %1818 = vmatpush.msra.mxu0 %v1746
      %1819 = vmatpush.msra.mxu0 %v1745
      %1820 = vmatpush.msra.mxu0 %v1744
      %1821 = vmatpush.msra.mxu0 %v1743
      %1822 = vmatpush.msra.mxu0 %v1742
      %1823 = vmatpush.msra.mxu0 %v1741
      %1824 = vmatpush.msra.mxu0 %v1740
      %1825 = vmatpush.msra.mxu0 %v1739
      %1826 = vmatpush.msra.mxu0 %v1738
      %1827 = vmatpush.msra.mxu0 %v1737
      %1828 = vmatpush.msra.mxu0 %v1736
      %1829 = vmatpush.msra.mxu0 %v1735
      %1830 = vmatpush.msra.mxu0 %v1734
      %1831 = vmatpush.msra.mxu0 %v1733
      %1832 = vmatpush.msra.mxu0 %v1732
      %1833 = vmatmul.f32.gmra.mxu0 %v1679
      %v1834 = vpop.f32.mrf.mxu0
      %v1835 = vadd.f32 %v1812, %v1834
      %1836 = vmatmul.f32.gmra.mxu0 %v1683
      %v1837 = vpop.f32.mrf.mxu0
      %v1838 = vadd.f32 %v1815, %v1837
      %1839 = vdwg.mxu0
      %v1840 = vld [vmem:[%s3] sm:$0xff]
      %v1841 = vld [vmem:[%s3 + $0x8] sm:$0xff]
      %v1842 = vlaneseq
      %v1843 = vand.u32 %v1842, 127
      %1844 = vset.pattern.permute.xlu0 0
      %1845 = vperm.xlu0 %1844, %v1840
      %v1846 = vpop.permute.xlu0 %1845
      %1847 = vset.pattern.permute.xlu0 0
      %1848 = vperm.xlu0 %1847, %v1841
      %v1849 = vpop.permute.xlu0 %1848
      %vm1850 = vcmp.eq.s32.totalorder %v1843, %v1846
      %vm1851 = vcmp.eq.s32.totalorder %v1843, %v1849
      %v1852 = vsel %vm1850, 1, 0
      %v1853 = vsel %vm1851, 1, 0
      %v1854 = vcvt.s32.f32 %v1852
      %v1855 = vcvt.s32.f32 %v1853
      %v1856 = vmul.f32 %v1835, %v1854
      %v1857 = vmul.f32 %v1838, %v1855
      %1858 = vadd.xlane.f32.xlu0 %v1856
      %v1859 = vpop.xlane.xlu0 %1858
      %1860 = vadd.xlane.f32.xlu0 %v1857
      %v1861 = vpop.xlane.xlu0 %1860
      %v1862 = vmul.f32 %v1859, %v1859
      %v1863 = vmul.f32 %v1861, %v1861
      %v1864 = vsub.f32 1.0, %v1862
      %v1865 = vsub.f32 1.0, %v1863
      %v1866 = vmax.f32 %v1864, 0.0
      %v1867 = vmax.f32 %v1865, 0.0
      %v1868 = vrsqrt.pop %v1866
      %v1869 = vmul.f32 %v1868, %v1866
      %v1870 = vmul.f32 %v1869, %v1868
      %v1871 = vmul.f32 0.5, %v1870
      %v1872 = vsub.f32 1.5, %v1871
      %v1873 = vmul.f32 %v1868, %v1872
      %v1874 = vmul.f32 %v1866, %v1873
      %vm1875 = vcmp.eq.f32.partialorder %v1866, inf
      %v1876 = vsel %vm1875, %v1866, %v1874
      %vm1877 = vcmp.eq.f32.partialorder %v1866, 0.0
      %v1878 = vand.u32 %v1866, 2147483648
      %v1879 = vsel %vm1877, %v1878, %v1876
      %v1880 = vrsqrt.pop %v1867
      %v1881 = vmul.f32 %v1880, %v1867
      %v1882 = vmul.f32 %v1881, %v1880
      %v1883 = vmul.f32 0.5, %v1882
      %v1884 = vsub.f32 1.5, %v1883
      %v1885 = vmul.f32 %v1880, %v1884
      %v1886 = vmul.f32 %v1867, %v1885
      %vm1887 = vcmp.eq.f32.partialorder %v1867, inf
      %v1888 = vsel %vm1887, %v1867, %v1886
      %vm1889 = vcmp.eq.f32.partialorder %v1867, 0.0
      %v1890 = vand.u32 %v1867, 2147483648
      %v1891 = vsel %vm1889, %v1890, %v1888
      %v1892 = vmul.f32 %v1859, 0.62161
      %v1893 = vmul.f32 %v1861, 0.62161
      %v1894 = vmul.f32 %v1879, 0.7833269
      %v1895 = vmul.f32 %v1891, 0.7833269
      %v1896 = vsub.f32 %v1892, %v1894
      %v1897 = vsub.f32 %v1893, %v1895
      %v1898 = vsub.f32 %v1896, %v1859
      %v1899 = vsub.f32 %v1897, %v1861
      %v1900 = vmul.f32 %v1854, %v1898
      %v1901 = vmul.f32 %v1855, %v1899
      %v1902 = vadd.f32 %v1835, %v1900
      %v1903 = vadd.f32 %v1838, %v1901
      %v1904 = vmul.f32 %v1902, 10.0
      %v1905 = vmul.f32 %v1903, 10.0
      %1906 = vst [vmem:[#allocation9] sm:$0xff] %v1904
      %1907 = vst [vmem:[#allocation9 + $0x8] sm:$0xff] %v1905
    $region37: #{tpu_custom_call.1} parent=1 // pred_fallthru
      _
    // Predicated region
    $region38: #{tpu_custom_call.1} parent=1 // pred_check
      _
    $region39: #{tpu_custom_call.1} parent=1 // pred_check_branch
      %1909 = sbr.rel (0) target = $region41
    $region40: #{tpu_custom_call.1} parent=1 // pred_region
      %1911 = vsyncadd [#allocation5], 0
      %s1912 = sshll.u32 [#allocation9], 4
      %s1913 = int_to_ptr.vmem [resolvable:$true] %s1912
      %s1914 = sshll.u32 %s4, 4
      %s1915 = int_to_ptr.hbm [resolvable:$true] %s1914
      %1920 = dma.vmem_to_hbm [thread:$0]  %s1913, 256, %s1915, [#allocation5], 128, 128, 8
    $region41: #{tpu_custom_call.1} parent=1 // pred_fallthru
      _
    // Predicated region
    $region42: #{tpu_custom_call.1} parent=1 // pred_check
      _
    $region43: #{tpu_custom_call.1} parent=1 // pred_check_branch
      %1922 = sbr.rel (0) target = $region45
    $region44: #{tpu_custom_call.1} parent=1 // pred_region
      %1924 = dma.done [#allocation5], 256
    $region45: #{tpu_custom_call.1} parent=1 // pred_fallthru
      _
    %1925 = vsyncpa [#allocation4], 1
    %1926 = vsyncpa [#allocation7], 1
    %1927 = vsyncpa [#allocation5], 1

</llo_original>
